<compile_context>
chip_gen: v7x
topology: tpu7x:2x2x1
jax: 0.10.0
libtpu: 0.0.40
codegen_flags: <defaults>
</compile_context>

<pallas_src>
import jax
import jax.numpy as jnp
import numpy as np
from jax import lax
from jax.experimental import pallas as pl
from jax.experimental.pallas import tpu as pltpu

# ---- model hyperparameters (module defaults) ----
D_X = 16          # input features
ENC_H = 256       # enc_hidden_dims
REP = 128         # rep_dim
K = 2             # number of treatments
OUT_H = 128       # outcome_hidden_dims
D_Y = 1           # outcome dim

MAX_TILE_B = 1024  # VMEM at 1024: ~0.5 MiB x-buffers + ~150 KiB weights -> tiny


def _semiite_kernel(x_ref, w1_ref, b1_ref, w23_ref, b23_ref,
                    w3t_ref, w4r_ref, b4_ref, out_ref):
    # Packed input: [x | one_hot(t, K)] as bf16. The one-hot columns hit zero
    # rows of the extended w1, so they are inert in the first layer.
    xin = x_ref[...]                                            # [T, D_X+K] bf16

    # ---- encoder layer 1: Linear -> ReLU (bf16 matmul, f32 accumulate) ----
    h1 = jnp.dot(xin, w1_ref[...],
                 preferred_element_type=jnp.float32) + b1_ref[...]
    h1 = jnp.maximum(h1, 0.0).astype(jnp.bfloat16)              # [T, ENC_H]

    # ---- folded enc-layer-2 + outcome[0]-layer-1 ----
    # W23 = w2 @ w3[:REP], B23 = b2 @ w3[:REP] + b3 (no nonlinearity between).
    h2 = jnp.dot(h1, w23_ref[...],
                 preferred_element_type=jnp.float32) + b23_ref[...]

    # one-hot treatment contribution: t1h @ w3[REP:], as K VPU multiply-adds.
    oh = xin[:, D_X:D_X + K].astype(jnp.float32)                # [T, K] in {0,1}
    for j in range(K):
        h2 = h2 + oh[:, j:j + 1] * w3t_ref[j:j + 1, :]
    h2 = jnp.maximum(h2, 0.0).astype(jnp.bfloat16)              # [T, OUT_H]

    # ---- head (D_Y == 1), produced directly in [1, T] lane-along-batch layout.
    # q@k^T-style contraction: (w4^T) [1, OUT_H] against h2 [T, OUT_H].
    out_row = lax.dot_general(
        w4r_ref[...], h2, (((1,), (1,)), ((), ())),
        preferred_element_type=jnp.float32)                     # [1, T] f32
    out_ref[...] = out_row + b4_ref[...]


def _pick_tile_b(batch, max_tile=MAX_TILE_B):
    """Largest multiple-of-128 tile <= max_tile that still leaves >= 2 grid
    steps when the batch allows it (so v7x's two TensorCores both get work)."""
    half = -(-batch // 2)
    t = -(-half // 128) * 128
    return max(128, min(max_tile, t))


def semiite_forward(x, t, kernel_params, *, tile_b=None):
    """x: [B, D_X] f32, t: [B] int. Returns [B, D_Y] f32."""
    B = x.shape[0]
    if tile_b is None:
        tile_b = _pick_tile_b(B)
    num_tiles = -(-B // tile_b)
    b_pad = num_tiles * tile_b

    # Pack [x | one_hot(t)] as bf16 (halves input DMA; out-of-range t -> zeros,
    # matching one_hot's all-zero row). Only build the padded copy if needed.
    t1h = jax.nn.one_hot(t.astype(jnp.int32), K, dtype=jnp.float32)
    xin = jnp.concatenate([x, t1h], axis=-1).astype(jnp.bfloat16)   # [B, D_X+K]
    if b_pad != B:
        xin = jnp.zeros((b_pad, D_X + K), jnp.bfloat16).at[:B].set(xin)

    def resident(shape):
        # Same block index every grid step -> stays in VMEM, no re-DMA.
        return pl.BlockSpec(shape, lambda i: (0, 0))

    grid_spec = pltpu.PrefetchScalarGridSpec(
        num_scalar_prefetch=0,
        grid=(num_tiles,),
        in_specs=[
            pl.BlockSpec((tile_b, D_X + K), lambda i: (i, 0)),  # packed x (pipelined)
            resident((D_X + K, ENC_H)), resident((1, ENC_H)),   # w1_ext, b1
            resident((ENC_H, OUT_H)),   resident((1, OUT_H)),   # W23, B23
            resident((K, OUT_H)),                               # w3t
            resident((D_Y, OUT_H)),     resident((1, D_Y)),     # w4^T, b4
        ],
        # Lane-dense-along-batch output row: (1, tile_b) f32 per step.
        out_specs=pl.BlockSpec((1, tile_b), lambda i: (0, i)),
    )

    out = pl.pallas_call(
        _semiite_kernel,
        out_shape=jax.ShapeDtypeStruct((1, b_pad), jnp.float32),
        grid_spec=grid_spec,
        compiler_params=pltpu.CompilerParams(
            dimension_semantics=("parallel",),   # shard batch across TCs (v7x)
        ),
    )(xin, *kernel_params)

    return out[0, :B].reshape(B, D_Y)


def make_params(seed=0):
    """Deterministic synthetic weights matching SemiITE's layer shapes."""
    key = jax.random.PRNGKey(seed)
    ks = jax.random.split(key, 8)

    def w(k, shape, fan_in):
        return jax.random.normal(k, shape, jnp.float32) / np.sqrt(fan_in)

    w1 = w(ks[0], (D_X, ENC_H), D_X)           # enc layer 1
    b1 = w(ks[1], (1, ENC_H), ENC_H)
    w2 = w(ks[2], (ENC_H, REP), ENC_H)         # enc layer 2
    b2 = w(ks[3], (1, REP), REP)
    w3 = w(ks[4], (REP + K, OUT_H), REP + K)   # outcome[0] layer 1 (on [z, t1h])
    b3 = w(ks[5], (1, OUT_H), OUT_H)
    w4 = w(ks[6], (OUT_H, D_Y), OUT_H)         # outcome[0] layer 2
    b4 = w(ks[7], (1, D_Y), D_Y)

    w3z, w3t = w3[:REP, :], w3[REP:, :]

    # Constant fold enc layer 2 into outcome layer 1 (no nonlinearity between).
    w23 = (w2 @ w3z).astype(jnp.bfloat16)                       # [ENC_H, OUT_H]
    b23 = b2 @ w3z + b3                                         # [1, OUT_H] f32
    # Extend w1 with K zero rows so the appended one-hot columns are inert.
    w1e = jnp.concatenate([w1, jnp.zeros((K, ENC_H), jnp.float32)],
                          axis=0).astype(jnp.bfloat16)          # [D_X+K, ENC_H]
    w4r = w4.T.astype(jnp.bfloat16)                             # [D_Y, OUT_H]

    kernel_params = (w1e, b1, w23, b23, w3t, w4r, b4)
    full_params = (w1, b1, w2, b2, w3, b3, w4, b4)
    return kernel_params, full_params


def reference_forward(x, t, full_params):
    """Pure-f32 JAX reference matching the PyTorch forward exactly."""
    w1, b1, w2, b2, w3, b3, w4, b4 = full_params
    h1 = jnp.maximum(x @ w1 + b1, 0.0)
    z = h1 @ w2 + b2
    t1h = jax.nn.one_hot(t.astype(jnp.int32), K, dtype=jnp.float32)
    cat = jnp.concatenate([z, t1h], axis=-1)
    h2 = jnp.maximum(cat @ w3 + b3, 0.0)
    return h2 @ w4 + b4


def reference_forward_mixed(x, t, kernel_params):
    """Reference mirroring the kernel's folded, mixed-precision computation."""
    w1e, b1, w23, b23, w3t, w4r, b4 = kernel_params
    t1h = jax.nn.one_hot(t.astype(jnp.int32), K, dtype=jnp.float32)
    xin = jnp.concatenate([x, t1h], axis=-1).astype(jnp.bfloat16)
    h1 = jnp.dot(xin, w1e, preferred_element_type=jnp.float32) + b1
    h1 = jnp.maximum(h1, 0.0).astype(jnp.bfloat16)
    h2 = jnp.dot(h1, w23, preferred_element_type=jnp.float32) + b23 + t1h @ w3t
    h2 = jnp.maximum(h2, 0.0).astype(jnp.bfloat16)
    return jnp.dot(h2, w4r.T, preferred_element_type=jnp.float32) + b4


if __name__ == "__main__":
    key = jax.random.PRNGKey(0)
    kx, kt = jax.random.split(key)

    B = 512  # with the tile cap this gives a 2-step grid (tile_b = 256)
    x = jax.random.normal(kx, (B, D_X), jnp.float32)
    t = jax.random.randint(kt, (B,), 0, K, jnp.int32)

    kernel_params, full_params = make_params(seed=0)

    out = semiite_forward(x, t, kernel_params)
    out = jax.block_until_ready(out)
    assert out.shape == (B, D_Y)

    # Tight check vs. a reference using the same folded bf16/f32 policy.
    ref_mixed = np.asarray(reference_forward_mixed(x, t, kernel_params))
    assert np.allclose(np.asarray(out), ref_mixed, atol=3e-3, rtol=3e-3)

    # Semantic check vs. the full-f32 PyTorch-equivalent forward
    # (tolerance accounts for bf16 weight/activation rounding and the fold).
    ref_f32 = np.asarray(reference_forward(x, t, full_params))
    assert np.allclose(np.asarray(out), ref_f32, atol=5e-2, rtol=5e-2)

    print("KERNEL_OK")
</pallas_src>

<mosaic_0001>
module attributes {stable_mosaic.version = 11 : i64} {
  func.func @_semiite_kernel(%arg0: i32, %arg1: memref<256x18xbf16, #tpu.memory_space<vmem>>, %arg2: memref<18x256xbf16, #tpu.memory_space<vmem>>, %arg3: memref<1x256xf32, #tpu.memory_space<vmem>>, %arg4: memref<256x128xbf16, #tpu.memory_space<vmem>>, %arg5: memref<1x128xf32, #tpu.memory_space<vmem>>, %arg6: memref<2x128xf32, #tpu.memory_space<vmem>>, %arg7: memref<1x128xbf16, #tpu.memory_space<vmem>>, %arg8: memref<1x1xf32, #tpu.memory_space<vmem>>, %arg9: memref<1x256xf32, #tpu.memory_space<vmem>>) attributes {dimension_semantics = [#tpu.dimension_semantics<parallel>], iteration_bounds = array<i64: 2>, scalar_prefetch = 0 : i64, scratch_operands = 0 : i64, tpu.core_type = #tpu.core_type<tc>, window_params = [{transform_indices = @transform_0, window_bounds = array<i64: 256, 18>}, {pipeline_mode = #tpu.pipeline_mode<synchronous>, transform_indices = @transform_1, window_bounds = array<i64: 18, 256>}, {pipeline_mode = #tpu.pipeline_mode<synchronous>, transform_indices = @transform_2, window_bounds = array<i64: 1, 256>}, {pipeline_mode = #tpu.pipeline_mode<synchronous>, transform_indices = @transform_3, window_bounds = array<i64: 256, 128>}, {pipeline_mode = #tpu.pipeline_mode<synchronous>, transform_indices = @transform_4, window_bounds = array<i64: 1, 128>}, {pipeline_mode = #tpu.pipeline_mode<synchronous>, transform_indices = @transform_5, window_bounds = array<i64: 2, 128>}, {pipeline_mode = #tpu.pipeline_mode<synchronous>, transform_indices = @transform_6, window_bounds = array<i64: 1, 128>}, {pipeline_mode = #tpu.pipeline_mode<synchronous>, transform_indices = @transform_7, window_bounds = array<i64: 1, 1>}, {transform_indices = @transform_8, window_bounds = array<i64: 1, 256>}]} {
    %c0 = arith.constant 0 : index
    %c0_0 = arith.constant 0 : index
    %0 = vector.load %arg1[%c0, %c0_0] : memref<256x18xbf16, #tpu.memory_space<vmem>>, vector<256x18xbf16>
    %c0_1 = arith.constant 0 : index
    %c0_2 = arith.constant 0 : index
    %1 = vector.load %arg2[%c0_1, %c0_2] : memref<18x256xbf16, #tpu.memory_space<vmem>>, vector<18x256xbf16>
    %cst = arith.constant dense<0.000000e+00> : vector<256x256xf32>
    %2 = tpu.matmul %0, %1, %cst {dimension_numbers = #tpu.dot_dimension_numbers<[1], [0], [0], [1], [0, 0, 1, 1], [], []>} : vector<256x18xbf16>, vector<18x256xbf16>, vector<256x256xf32> -> vector<256x256xf32>
    %c0_3 = arith.constant 0 : index
    %c0_4 = arith.constant 0 : index
    %3 = vector.load %arg3[%c0_3, %c0_4] : memref<1x256xf32, #tpu.memory_space<vmem>>, vector<1x256xf32>
    %4 = vector.broadcast %3 : vector<1x256xf32> to vector<256x256xf32>
    %5 = arith.addf %2, %4 : vector<256x256xf32>
    %cst_5 = arith.constant 0.000000e+00 : f32
    %6 = vector.broadcast %cst_5 : f32 to vector<256x256xf32>
    %7 = arith.maximumf %5, %6 : vector<256x256xf32>
    %8 = arith.truncf %7 : vector<256x256xf32> to vector<256x256xbf16>
    %c0_6 = arith.constant 0 : index
    %c0_7 = arith.constant 0 : index
    %9 = vector.load %arg4[%c0_6, %c0_7] : memref<256x128xbf16, #tpu.memory_space<vmem>>, vector<256x128xbf16>
    %cst_8 = arith.constant dense<0.000000e+00> : vector<256x128xf32>
    %10 = tpu.matmul %8, %9, %cst_8 {dimension_numbers = #tpu.dot_dimension_numbers<[1], [0], [0], [1], [0, 0, 1, 1], [], []>} : vector<256x256xbf16>, vector<256x128xbf16>, vector<256x128xf32> -> vector<256x128xf32>
    %c0_9 = arith.constant 0 : index
    %c0_10 = arith.constant 0 : index
    %11 = vector.load %arg5[%c0_9, %c0_10] : memref<1x128xf32, #tpu.memory_space<vmem>>, vector<1x128xf32>
    %12 = vector.broadcast %11 : vector<1x128xf32> to vector<256x128xf32>
    %13 = arith.addf %10, %12 : vector<256x128xf32>
    %14 = vector.extract_strided_slice %0 {offsets = [0, 16], sizes = [256, 2], strides = [1, 1]} : vector<256x18xbf16> to vector<256x2xbf16>
    %15 = arith.extf %14 : vector<256x2xbf16> to vector<256x2xf32>
    %16 = vector.extract_strided_slice %15 {offsets = [0, 0], sizes = [256, 1], strides = [1, 1]} : vector<256x2xf32> to vector<256x1xf32>
    %c0_11 = arith.constant 0 : index
    %c0_12 = arith.constant 0 : index
    %17 = vector.load %arg6[%c0_11, %c0_12] : memref<2x128xf32, #tpu.memory_space<vmem>>, vector<1x128xf32>
    %18 = vector.broadcast %16 : vector<256x1xf32> to vector<256x128xf32>
    %19 = vector.broadcast %17 : vector<1x128xf32> to vector<256x128xf32>
    %20 = arith.mulf %18, %19 : vector<256x128xf32>
    %21 = arith.addf %13, %20 : vector<256x128xf32>
    %22 = vector.extract_strided_slice %15 {offsets = [0, 1], sizes = [256, 1], strides = [1, 1]} : vector<256x2xf32> to vector<256x1xf32>
    %c1 = arith.constant 1 : index
    %c0_13 = arith.constant 0 : index
    %23 = vector.load %arg6[%c1, %c0_13] : memref<2x128xf32, #tpu.memory_space<vmem>>, vector<1x128xf32>
    %24 = vector.broadcast %22 : vector<256x1xf32> to vector<256x128xf32>
    %25 = vector.broadcast %23 : vector<1x128xf32> to vector<256x128xf32>
    %26 = arith.mulf %24, %25 : vector<256x128xf32>
    %27 = arith.addf %21, %26 : vector<256x128xf32>
    %cst_14 = arith.constant 0.000000e+00 : f32
    %28 = vector.broadcast %cst_14 : f32 to vector<256x128xf32>
    %29 = arith.maximumf %27, %28 : vector<256x128xf32>
    %30 = arith.truncf %29 : vector<256x128xf32> to vector<256x128xbf16>
    %c0_15 = arith.constant 0 : index
    %c0_16 = arith.constant 0 : index
    %31 = vector.load %arg7[%c0_15, %c0_16] : memref<1x128xbf16, #tpu.memory_space<vmem>>, vector<1x128xbf16>
    %cst_17 = arith.constant dense<0.000000e+00> : vector<1x256xf32>
    %32 = tpu.matmul %31, %30, %cst_17 {dimension_numbers = #tpu.dot_dimension_numbers<[1], [1], [0], [0], [0, 0, 1, 0], [], []>} : vector<1x128xbf16>, vector<256x128xbf16>, vector<1x256xf32> -> vector<1x256xf32>
    %c0_18 = arith.constant 0 : index
    %c0_19 = arith.constant 0 : index
    %33 = vector.load %arg8[%c0_18, %c0_19] : memref<1x1xf32, #tpu.memory_space<vmem>>, vector<1x1xf32>
    %34 = vector.broadcast %33 : vector<1x1xf32> to vector<1x256xf32>
    %35 = arith.addf %32, %34 : vector<1x256xf32>
    %c0_20 = arith.constant 0 : index
    %c0_21 = arith.constant 0 : index
    %36 = vector.load %arg9[%c0_20, %c0_21] : memref<1x256xf32, #tpu.memory_space<vmem>>, vector<1x256xf32>
    tpu.vector_store %arg9[%c0_20, %c0_21], %35 {strides = array<i32>} : memref<1x256xf32, #tpu.memory_space<vmem>>, vector<1x256xf32>,
    return
  }
  func.func @transform_0(%arg0: i32) -> (i32, i32) {
    %c0_i32 = arith.constant 0 : i32
    %c0_i32_0 = arith.constant 0 : i32
    return %arg0, %c0_i32 : i32, i32
  }
  func.func @transform_1(%arg0: i32) -> (i32, i32) {
    %c0_i32 = arith.constant 0 : i32
    %c0_i32_0 = arith.constant 0 : i32
    %c0_i32_1 = arith.constant 0 : i32
    return %c0_i32, %c0_i32_0 : i32, i32
  }
  func.func @transform_2(%arg0: i32) -> (i32, i32) {
    %c0_i32 = arith.constant 0 : i32
    %c0_i32_0 = arith.constant 0 : i32
    %c0_i32_1 = arith.constant 0 : i32
    return %c0_i32, %c0_i32_0 : i32, i32
  }
  func.func @transform_3(%arg0: i32) -> (i32, i32) {
    %c0_i32 = arith.constant 0 : i32
    %c0_i32_0 = arith.constant 0 : i32
    %c0_i32_1 = arith.constant 0 : i32
    return %c0_i32, %c0_i32_0 : i32, i32
  }
  func.func @transform_4(%arg0: i32) -> (i32, i32) {
    %c0_i32 = arith.constant 0 : i32
    %c0_i32_0 = arith.constant 0 : i32
    %c0_i32_1 = arith.constant 0 : i32
    return %c0_i32, %c0_i32_0 : i32, i32
  }
  func.func @transform_5(%arg0: i32) -> (i32, i32) {
    %c0_i32 = arith.constant 0 : i32
    %c0_i32_0 = arith.constant 0 : i32
    %c0_i32_1 = arith.constant 0 : i32
    return %c0_i32, %c0_i32_0 : i32, i32
  }
  func.func @transform_6(%arg0: i32) -> (i32, i32) {
    %c0_i32 = arith.constant 0 : i32
    %c0_i32_0 = arith.constant 0 : i32
    %c0_i32_1 = arith.constant 0 : i32
    return %c0_i32, %c0_i32_0 : i32, i32
  }
  func.func @transform_7(%arg0: i32) -> (i32, i32) {
    %c0_i32 = arith.constant 0 : i32
    %c0_i32_0 = arith.constant 0 : i32
    %c0_i32_1 = arith.constant 0 : i32
    return %c0_i32, %c0_i32_0 : i32, i32
  }
  func.func @transform_8(%arg0: i32) -> (i32, i32) {
    %c0_i32 = arith.constant 0 : i32
    %c0_i32_0 = arith.constant 0 : i32
    return %c0_i32, %arg0 : i32, i32
  }
}

</mosaic_0001>

<llo_original>
// kernel: tpu_custom_call.1
$region0: #{tpu_custom_call.1}
  #allocation0 [shape = 'u32[]', space=smem, size = 0x4, offset = 0x4, fixed_abs, tag = 'smem constant byte address 0x4 - core index']
  #allocation1 [shape = 'u32[144,128]{1,0:T(1,128)}', space=vmem, size = 0x12000, scoped, tag = 'internal scratch']
  #allocation2 [shape = 'f32[1,1]{1,0:T(1,128)S(1)}', space=vmem, size = 0x200, scoped, tag = 'scoped memory for tpu_custom_call.1']
  %s0 = inlined_call_operand.vmem [shape: bf16[512,18], index: 0, kind: input, shape index: {}]
  %s1 = inlined_call_operand.vmem [shape: bf16[18,256], index: 1, kind: input, shape index: {}]
  %s2 = inlined_call_operand.vmem [shape: f32[1,256], index: 2, kind: input, shape index: {}]
  %s3 = inlined_call_operand.vmem [shape: bf16[256,128], index: 3, kind: input, shape index: {}]
  %s4 = inlined_call_operand.vmem [shape: f32[1,128], index: 4, kind: input, shape index: {}]
  %s5 = inlined_call_operand.vmem [shape: f32[2,128], index: 5, kind: input, shape index: {}]
  %s6 = inlined_call_operand.vmem [shape: bf16[1,128], index: 6, kind: input, shape index: {}]
  %s7 = inlined_call_operand.<no memory space> [shape: f32[1,1], index: 7, kind: input, shape index: {}]
  %s8 = inlined_call_operand.hbm [shape: f32[1,512], index: 8, kind: output, shape index: {}]
  %s9 = sld [smem:[#allocation0]]
  $region65: #{tpu_custom_call.1} parent=0
    _
  %s11 = ssub.s32 1, %s9
  %s12 = scalar_select 0, %s11, %s9
  %v13 = vstv %s7
  %14 = vst [vmem:[#allocation2] sm:$0x1] %v13
  $region1: #{tpu_custom_call.1} parent=0
    #allocation3 [shape = 'u8[2048]{0}', space=vmem, size = 0x800, scoped, tag = 'output window, operand 0']
    #allocation4 [shape = 's32[2]{0}', space=sflag, size = 0x8, scoped, tag = 'scoped memory for tpu_custom_call.1']
    %15 = vsyncpa [#allocation4], 0
    %s16 = scalar_lea.sflag [#allocation4], 1
    %17 = vsyncpa %s16, 0
    loop: start=0, step=1, limit=4
    $region2: #{tpu_custom_call.1} parent=1 // loop_pre_header
      _
    $region3: #{tpu_custom_call.1} parent=1 // loop_header
      %s19 = sphi 0, %s23
      %p20 = scmp.ge.s32.totalorder %s19, 4
      %s29 = sphi 0, %s31
      %s32 = sphi 0, %s29
      %s33 = sphi 0, %s32
      %s49 = sphi 0, %s33
      %s53 = sphi 0, %s53
      %s55 = sphi 0, %s53
      %s56 = sphi 0, %s55
      %s70 = sphi 0, %s56
      %s74 = sphi 0, %s74
      %s76 = sphi 0, %s74
      %s77 = sphi 0, %s76
      %s91 = sphi 0, %s77
      %s95 = sphi 0, %s95
      %s97 = sphi 0, %s95
      %s98 = sphi 0, %s97
      %s112 = sphi 0, %s98
      %s116 = sphi 0, %s116
      %s118 = sphi 0, %s116
      %s119 = sphi 0, %s118
      %s133 = sphi 0, %s119
      %s137 = sphi 0, %s137
      %s139 = sphi 0, %s137
      %s140 = sphi 0, %s139
      %s154 = sphi 0, %s140
      %s158 = sphi 0, %s158
      %s160 = sphi 0, %s158
      %s161 = sphi 0, %s160
      %s175 = sphi 0, %s161
      %s179 = sphi 0, %s179
      %s181 = sphi 0, %s179
      %s182 = sphi 0, %s181
      %s196 = sphi 0, %s182
      %s202 = sphi 0, %s204
      %s205 = sphi 0, %s202
      %s206 = sphi 0, %s205
      %s222 = sphi 0, %s206
    $region4: #{tpu_custom_call.1} parent=1 // loop_header_branch
      %22 = sbr.rel (%p20) target = $region8
    $region5: #{tpu_custom_call.1} parent=1 // loop_body
      %s24 = ssub.s32 %s19, 1
      %s25 = ssub.s32 %s19, 2
      %s26 = sadd.s32 %s19, 1
      %s27 = ssub.s32 %s19, %s26
      %p28 = scmp.eq.s32.totalorder %s27, 0
      %s30 = sadd.s32 %s29, 1
      %s31 = scalar_select %p28, %s29, %s30
      %p34 = pneg %p28
      %p35 = scmp.eq.s32.totalorder %s19, 1
      %p36 = por %p34, %p35
      %p37 = scmp.ne.s32.totalorder %s29, %s32
      %p38 = scmp.eq.s32.totalorder %s19, 0
      %p39 = por %p37, %p38
      %p40 = scmp.ne.s32.totalorder %s29, %s32
      %p41 = scmp.eq.s32.totalorder %s24, 1
      %p42 = por %p40, %p41
      %p43 = scmp.ne.s32.totalorder %s32, %s33
      %p44 = scmp.eq.s32.totalorder %s24, 0
      %p45 = por %p43, %p44
      %p46 = scmp.ne.s32.totalorder %s32, %s33
      %p47 = scmp.eq.s32.totalorder %s25, 1
      %p48 = por %p46, %p47
      %p50 = scmp.ne.s32.totalorder %s33, %s49
      %p51 = scmp.eq.s32.totalorder %s25, 0
      %p52 = por %p50, %p51
      %s54 = sadd.s32 %s53, 1
      %p57 = scmp.eq.s32.totalorder %s19, 1
      %p58 = scmp.ne.s32.totalorder %s53, %s55
      %p59 = scmp.eq.s32.totalorder %s19, 0
      %p60 = por %p58, %p59
      %p61 = scmp.ne.s32.totalorder %s53, %s55
      %p62 = scmp.eq.s32.totalorder %s24, 1
      %p63 = por %p61, %p62
      %p64 = scmp.ne.s32.totalorder %s55, %s56
      %p65 = scmp.eq.s32.totalorder %s24, 0
      %p66 = por %p64, %p65
      %p67 = scmp.ne.s32.totalorder %s55, %s56
      %p68 = scmp.eq.s32.totalorder %s25, 1
      %p69 = por %p67, %p68
      %p71 = scmp.ne.s32.totalorder %s56, %s70
      %p72 = scmp.eq.s32.totalorder %s25, 0
      %p73 = por %p71, %p72
      %s75 = sadd.s32 %s74, 1
      %p78 = scmp.eq.s32.totalorder %s19, 1
      %p79 = scmp.ne.s32.totalorder %s74, %s76
      %p80 = scmp.eq.s32.totalorder %s19, 0
      %p81 = por %p79, %p80
      %p82 = scmp.ne.s32.totalorder %s74, %s76
      %p83 = scmp.eq.s32.totalorder %s24, 1
      %p84 = por %p82, %p83
      %p85 = scmp.ne.s32.totalorder %s76, %s77
      %p86 = scmp.eq.s32.totalorder %s24, 0
      %p87 = por %p85, %p86
      %p88 = scmp.ne.s32.totalorder %s76, %s77
      %p89 = scmp.eq.s32.totalorder %s25, 1
      %p90 = por %p88, %p89
      %p92 = scmp.ne.s32.totalorder %s77, %s91
      %p93 = scmp.eq.s32.totalorder %s25, 0
      %p94 = por %p92, %p93
      %s96 = sadd.s32 %s95, 1
      %p99 = scmp.eq.s32.totalorder %s19, 1
      %p100 = scmp.ne.s32.totalorder %s95, %s97
      %p101 = scmp.eq.s32.totalorder %s19, 0
      %p102 = por %p100, %p101
      %p103 = scmp.ne.s32.totalorder %s95, %s97
      %p104 = scmp.eq.s32.totalorder %s24, 1
      %p105 = por %p103, %p104
      %p106 = scmp.ne.s32.totalorder %s97, %s98
      %p107 = scmp.eq.s32.totalorder %s24, 0
      %p108 = por %p106, %p107
      %p109 = scmp.ne.s32.totalorder %s97, %s98
      %p110 = scmp.eq.s32.totalorder %s25, 1
      %p111 = por %p109, %p110
      %p113 = scmp.ne.s32.totalorder %s98, %s112
      %p114 = scmp.eq.s32.totalorder %s25, 0
      %p115 = por %p113, %p114
      %s117 = sadd.s32 %s116, 1
      %p120 = scmp.eq.s32.totalorder %s19, 1
      %p121 = scmp.ne.s32.totalorder %s116, %s118
      %p122 = scmp.eq.s32.totalorder %s19, 0
      %p123 = por %p121, %p122
      %p124 = scmp.ne.s32.totalorder %s116, %s118
      %p125 = scmp.eq.s32.totalorder %s24, 1
      %p126 = por %p124, %p125
      %p127 = scmp.ne.s32.totalorder %s118, %s119
      %p128 = scmp.eq.s32.totalorder %s24, 0
      %p129 = por %p127, %p128
      %p130 = scmp.ne.s32.totalorder %s118, %s119
      %p131 = scmp.eq.s32.totalorder %s25, 1
      %p132 = por %p130, %p131
      %p134 = scmp.ne.s32.totalorder %s119, %s133
      %p135 = scmp.eq.s32.totalorder %s25, 0
      %p136 = por %p134, %p135
      %s138 = sadd.s32 %s137, 1
      %p141 = scmp.eq.s32.totalorder %s19, 1
      %p142 = scmp.ne.s32.totalorder %s137, %s139
      %p143 = scmp.eq.s32.totalorder %s19, 0
      %p144 = por %p142, %p143
      %p145 = scmp.ne.s32.totalorder %s137, %s139
      %p146 = scmp.eq.s32.totalorder %s24, 1
      %p147 = por %p145, %p146
      %p148 = scmp.ne.s32.totalorder %s139, %s140
      %p149 = scmp.eq.s32.totalorder %s24, 0
      %p150 = por %p148, %p149
      %p151 = scmp.ne.s32.totalorder %s139, %s140
      %p152 = scmp.eq.s32.totalorder %s25, 1
      %p153 = por %p151, %p152
      %p155 = scmp.ne.s32.totalorder %s140, %s154
      %p156 = scmp.eq.s32.totalorder %s25, 0
      %p157 = por %p155, %p156
      %s159 = sadd.s32 %s158, 1
      %p162 = scmp.eq.s32.totalorder %s19, 1
      %p163 = scmp.ne.s32.totalorder %s158, %s160
      %p164 = scmp.eq.s32.totalorder %s19, 0
      %p165 = por %p163, %p164
      %p166 = scmp.ne.s32.totalorder %s158, %s160
      %p167 = scmp.eq.s32.totalorder %s24, 1
      %p168 = por %p166, %p167
      %p169 = scmp.ne.s32.totalorder %s160, %s161
      %p170 = scmp.eq.s32.totalorder %s24, 0
      %p171 = por %p169, %p170
      %p172 = scmp.ne.s32.totalorder %s160, %s161
      %p173 = scmp.eq.s32.totalorder %s25, 1
      %p174 = por %p172, %p173
      %p176 = scmp.ne.s32.totalorder %s161, %s175
      %p177 = scmp.eq.s32.totalorder %s25, 0
      %p178 = por %p176, %p177
      %s180 = sadd.s32 %s179, 1
      %p183 = scmp.eq.s32.totalorder %s19, 1
      %p184 = scmp.ne.s32.totalorder %s179, %s181
      %p185 = scmp.eq.s32.totalorder %s19, 0
      %p186 = por %p184, %p185
      %p187 = scmp.ne.s32.totalorder %s179, %s181
      %p188 = scmp.eq.s32.totalorder %s24, 1
      %p189 = por %p187, %p188
      %p190 = scmp.ne.s32.totalorder %s181, %s182
      %p191 = scmp.eq.s32.totalorder %s24, 0
      %p192 = por %p190, %p191
      %p193 = scmp.ne.s32.totalorder %s181, %s182
      %p194 = scmp.eq.s32.totalorder %s25, 1
      %p195 = por %p193, %p194
      %p197 = scmp.ne.s32.totalorder %s182, %s196
      %p198 = scmp.eq.s32.totalorder %s25, 0
      %p199 = por %p197, %p198
      %s200 = ssub.s32 %s19, %s26
      %p201 = scmp.eq.s32.totalorder %s200, 0
      %s203 = sadd.s32 %s202, 1
      %s204 = scalar_select %p201, %s202, %s203
      %p207 = pneg %p201
      %p208 = scmp.eq.s32.totalorder %s19, 1
      %p209 = por %p207, %p208
      %p210 = scmp.ne.s32.totalorder %s202, %s205
      %p211 = scmp.eq.s32.totalorder %s19, 0
      %p212 = por %p210, %p211
      %p213 = scmp.ne.s32.totalorder %s202, %s205
      %p214 = scmp.eq.s32.totalorder %s24, 1
      %p215 = por %p213, %p214
      %p216 = scmp.ne.s32.totalorder %s205, %s206
      %p217 = scmp.eq.s32.totalorder %s24, 0
      %p218 = por %p216, %p217
      %p219 = scmp.ne.s32.totalorder %s205, %s206
      %p220 = scmp.eq.s32.totalorder %s25, 1
      %p221 = por %p219, %p220
      %p223 = scmp.ne.s32.totalorder %s206, %s222
      %p224 = scmp.eq.s32.totalorder %s25, 0
      %p225 = por %p223, %p224
      %p226 = scmp.le.s32.totalorder 1, %s19
      %p227 = scmp.lt.s32.totalorder %s19, 3
      %p228 = pnand %p226, %p227
      %p229 = pneg %p228
      // Predicated region
      $region9: #{tpu_custom_call.1} parent=5 // pred_check
        _
      $region10: #{tpu_custom_call.1} parent=5 // pred_check_branch
        %231 = sbr.rel (%p228) target = $region12
      $region11: #{tpu_custom_call.1} parent=5 // pred_region
        %s232 = ssub.s32 %s19, 1
        // Predicated region
        $region13: #{tpu_custom_call.1} parent=11 // pred_check
          %p233 = pneg %p66
        $region14: #{tpu_custom_call.1} parent=11 // pred_check_branch
          %235 = sbr.rel (%p233) target = $region16
        $region15: #{tpu_custom_call.1} parent=11 // pred_region
          _
        $region16: #{tpu_custom_call.1} parent=11 // pred_fallthru
          _
        // Predicated region
        $region17: #{tpu_custom_call.1} parent=11 // pred_check
          %p236 = pneg %p87
        $region18: #{tpu_custom_call.1} parent=11 // pred_check_branch
          %238 = sbr.rel (%p236) target = $region20
        $region19: #{tpu_custom_call.1} parent=11 // pred_region
          _
        $region20: #{tpu_custom_call.1} parent=11 // pred_fallthru
          _
        // Predicated region
        $region21: #{tpu_custom_call.1} parent=11 // pred_check
          %p239 = pneg %p108
        $region22: #{tpu_custom_call.1} parent=11 // pred_check_branch
          %241 = sbr.rel (%p239) target = $region24
        $region23: #{tpu_custom_call.1} parent=11 // pred_region
          _
        $region24: #{tpu_custom_call.1} parent=11 // pred_fallthru
          _
        // Predicated region
        $region25: #{tpu_custom_call.1} parent=11 // pred_check
          %p242 = pneg %p129
        $region26: #{tpu_custom_call.1} parent=11 // pred_check_branch
          %244 = sbr.rel (%p242) target = $region28
        $region27: #{tpu_custom_call.1} parent=11 // pred_region
          _
        $region28: #{tpu_custom_call.1} parent=11 // pred_fallthru
          _
        // Predicated region
        $region29: #{tpu_custom_call.1} parent=11 // pred_check
          %p245 = pneg %p150
        $region30: #{tpu_custom_call.1} parent=11 // pred_check_branch
          %247 = sbr.rel (%p245) target = $region32
        $region31: #{tpu_custom_call.1} parent=11 // pred_region
          _
        $region32: #{tpu_custom_call.1} parent=11 // pred_fallthru
          _
        // Predicated region
        $region33: #{tpu_custom_call.1} parent=11 // pred_check
          %p248 = pneg %p171
        $region34: #{tpu_custom_call.1} parent=11 // pred_check_branch
          %250 = sbr.rel (%p248) target = $region36
        $region35: #{tpu_custom_call.1} parent=11 // pred_region
          _
        $region36: #{tpu_custom_call.1} parent=11 // pred_fallthru
          _
        // Predicated region
        $region37: #{tpu_custom_call.1} parent=11 // pred_check
          %p251 = pneg %p192
        $region38: #{tpu_custom_call.1} parent=11 // pred_check_branch
          %253 = sbr.rel (%p251) target = $region40
        $region39: #{tpu_custom_call.1} parent=11 // pred_region
          _
        $region40: #{tpu_custom_call.1} parent=11 // pred_fallthru
          _
      $region12: #{tpu_custom_call.1} parent=5 // pred_fallthru
        _
      %p254 = scmp.lt.s32.totalorder %s19, 2
      // Predicated region
      $region41: #{tpu_custom_call.1} parent=5 // pred_check
        %p255 = pneg %p254
      $region42: #{tpu_custom_call.1} parent=5 // pred_check_branch
        %257 = sbr.rel (%p255) target = $region44
      $region43: #{tpu_custom_call.1} parent=5 // pred_region
        // Predicated region
        $region45: #{tpu_custom_call.1} parent=43 // pred_check
          %p258 = pneg %p39
        $region46: #{tpu_custom_call.1} parent=43 // pred_check_branch
          %260 = sbr.rel (%p258) target = $region48
        $region47: #{tpu_custom_call.1} parent=43 // pred_region
          %s261 = smul.u32 32, %s19
          %p262 = scmp.lt.s32.totalorder %s261, 63
          %s263 = scalar_select %p262, %s261, 63
          %s264 = smul.addr %s263, 4
          %s265 = scalar_lea.vmem %s0, %s264
          %s266 = smul.u32 32, %s19
        $region48: #{tpu_custom_call.1} parent=43 // pred_fallthru
          _
      $region44: #{tpu_custom_call.1} parent=5 // pred_fallthru
        _
      %p267 = scmp.le.s32.totalorder 1, %s19
      %p268 = scmp.lt.s32.totalorder %s19, 3
      %p269 = pnand %p267, %p268
      %p270 = pneg %p269
      // Predicated region
      $region49: #{tpu_custom_call.1} parent=5 // pred_check
        _
      $region50: #{tpu_custom_call.1} parent=5 // pred_check_branch
        %272 = sbr.rel (%p269) target = $region52
      $region51: #{tpu_custom_call.1} parent=5 // pred_region
        %s273 = ssub.s32 %s19, 1
        %s274 = smul.u32 32, %s24
        %p275 = scmp.lt.s32.totalorder %s274, 63
        %s276 = scalar_select %p275, %s274, 63
        %s277 = smul.addr %s276, 4
        %s278 = scalar_lea.vmem %s0, %s277
        %p279 = pneg %p45
        %p280 = pneg %p42
        %p281 = pneg %p66
        %p282 = pneg %p63
        %p283 = pneg %p87
        %p284 = pneg %p84
        %p285 = pneg %p108
        %p286 = pneg %p105
        %p287 = pneg %p129
        %p288 = pneg %p126
        %p289 = pneg %p150
        %p290 = pneg %p147
        %p291 = pneg %p171
        %p292 = pneg %p168
        %p293 = pneg %p192
        %p294 = pneg %p189
        %p295 = pneg %p218
        %p296 = pneg %p215
        %s297 = sand.u32 %s205, 1
        %s298 = scalar_lea.sflag [#allocation4], %s297
        %s299 = sand.u32 %s205, 1
        %s300 = smul.addr %s299, 2
        %s301 = scalar_lea.vmem [#allocation3], %s300
        %s302 = smul.u32 32, %s24
        %p303 = scmp.lt.s32.totalorder %s302, 63
        %s304 = scalar_select %p303, %s302, 63
        %s305 = smul.addr %s304, 4
        %s306 = scalar_lea.vmem %s0, %s305
        %s307 = smul.u32 32, %s24
        %s308 = smul.u32 2, %s24
        %v310 = vld [vmem:[%s306] sm:$0xf]
        %v311 = vld [vmem:[%s306 + $0x4] sm:$0xf]
        %v312 = vld [vmem:[%s306 + $0x8] sm:$0xf]
        %v313 = vld [vmem:[%s306 + $0xc] sm:$0xf]
        %v314 = vld [vmem:[%s306 + $0x10] sm:$0xf]
        %v315 = vld [vmem:[%s306 + $0x14] sm:$0xf]
        %v316 = vld [vmem:[%s306 + $0x18] sm:$0xf]
        %v317 = vld [vmem:[%s306 + $0x1c] sm:$0xf]
        %v318 = vld [vmem:[%s306 + $0x20] sm:$0xf]
        %v319 = vld [vmem:[%s306 + $0x24] sm:$0xf]
        %v320 = vld [vmem:[%s306 + $0x28] sm:$0xf]
        %v321 = vld [vmem:[%s306 + $0x2c] sm:$0xf]
        %v322 = vld [vmem:[%s306 + $0x30] sm:$0xf]
        %v323 = vld [vmem:[%s306 + $0x34] sm:$0xf]
        %v324 = vld [vmem:[%s306 + $0x38] sm:$0xf]
        %v325 = vld [vmem:[%s306 + $0x3c] sm:$0xf]
        %v326 = vld [vmem:[%s306 + $0x40] sm:$0xf]
        %v327 = vld [vmem:[%s306 + $0x44] sm:$0xf]
        %v328 = vld [vmem:[%s306 + $0x48] sm:$0xf]
        %v329 = vld [vmem:[%s306 + $0x4c] sm:$0xf]
        %v330 = vld [vmem:[%s306 + $0x50] sm:$0xf]
        %v331 = vld [vmem:[%s306 + $0x54] sm:$0xf]
        %v332 = vld [vmem:[%s306 + $0x58] sm:$0xf]
        %v333 = vld [vmem:[%s306 + $0x5c] sm:$0xf]
        %v334 = vld [vmem:[%s306 + $0x60] sm:$0xf]
        %v335 = vld [vmem:[%s306 + $0x64] sm:$0xf]
        %v336 = vld [vmem:[%s306 + $0x68] sm:$0xf]
        %v337 = vld [vmem:[%s306 + $0x6c] sm:$0xf]
        %v338 = vld [vmem:[%s306 + $0x70] sm:$0xf]
        %v339 = vld [vmem:[%s306 + $0x74] sm:$0xf]
        %v340 = vld [vmem:[%s306 + $0x78] sm:$0xf]
        %v341 = vld [vmem:[%s306 + $0x7c] sm:$0xf]
        %v342 = vld [vmem:[%s1] sm:$0xff]
        %v343 = vld [vmem:[%s1 + $0x8] sm:$0xff]
        %v344 = vld [vmem:[%s1 + $0x10] sm:$0x11]
        %v345 = vld [vmem:[%s2] sm:$0x3]
        %v347 = vlaneseq
        %v348 = vshrl.u32 %v347, 7
        %v349 = vsub.s32 0, %v348
        %v350 = vrot.slane %v345, %v349
        %v351 = vlaneseq
        %v352 = vshrl.u32 %v351, 7
        %v353 = vsub.s32 1, %v352
        %v354 = vrot.slane %v345, %v353
        %v389 = vunpack.c.l.b16 %v310
        %v390 = vunpack.c.l.b16 %v311
        %v391 = vunpack.c.l.b16 %v312
        %v392 = vunpack.c.l.b16 %v313
        %v393 = vunpack.c.l.b16 %v314
        %v394 = vunpack.c.l.b16 %v315
        %v395 = vunpack.c.l.b16 %v316
        %v396 = vunpack.c.l.b16 %v317
        %v397 = vunpack.c.l.b16 %v318
        %v398 = vunpack.c.l.b16 %v319
        %v399 = vunpack.c.l.b16 %v320
        %v400 = vunpack.c.l.b16 %v321
        %v401 = vunpack.c.l.b16 %v322
        %v402 = vunpack.c.l.b16 %v323
        %v403 = vunpack.c.l.b16 %v324
        %v404 = vunpack.c.l.b16 %v325
        %v405 = vunpack.c.l.b16 %v326
        %v406 = vunpack.c.l.b16 %v327
        %v407 = vunpack.c.l.b16 %v328
        %v408 = vunpack.c.l.b16 %v329
        %v409 = vunpack.c.l.b16 %v330
        %v410 = vunpack.c.l.b16 %v331
        %v411 = vunpack.c.l.b16 %v332
        %v412 = vunpack.c.l.b16 %v333
        %v413 = vunpack.c.l.b16 %v334
        %v414 = vunpack.c.l.b16 %v335
        %v415 = vunpack.c.l.b16 %v336
        %v416 = vunpack.c.l.b16 %v337
        %v417 = vunpack.c.l.b16 %v338
        %v418 = vunpack.c.l.b16 %v339
        %v419 = vunpack.c.l.b16 %v340
        %v420 = vunpack.c.l.b16 %v341
        %v421 = vpack.c.b16 %v390, %v389
        %v422 = vpack.c.b16 %v392, %v391
        %v423 = vpack.c.b16 %v394, %v393
        %v424 = vpack.c.b16 %v396, %v395
        %v425 = vpack.c.b16 %v398, %v397
        %v426 = vpack.c.b16 %v400, %v399
        %v427 = vpack.c.b16 %v402, %v401
        %v428 = vpack.c.b16 %v404, %v403
        %v429 = vpack.c.b16 %v406, %v405
        %v430 = vpack.c.b16 %v408, %v407
        %v431 = vpack.c.b16 %v410, %v409
        %v432 = vpack.c.b16 %v412, %v411
        %v433 = vpack.c.b16 %v414, %v413
        %v434 = vpack.c.b16 %v416, %v415
        %v435 = vpack.c.b16 %v418, %v417
        %v436 = vpack.c.b16 %v420, %v419
        %v440 = vunpack.c.l.b16 %v342
        %v441 = vunpack.c.h.b16 %v342
        %v442 = vunpack.c.l.b16 %v343
        %v443 = vunpack.c.h.b16 %v343
        %v444 = vunpack.c.l.b16 %v344
        %v445 = vunpack.c.h.b16 %v344
        %v446 = vpack.c.b16 %v442, %v440
        %v447 = vpack.c.b16 %v443, %v441
        %v448 = vpack.c.b16 %v444, %v444
        %v449 = vpack.c.b16 %v445, %v445
        %vm452 = vcmask 146432
        %v454 = vsel %vm452, %v421, 0
        %v457 = vsel %vm452, %v422, 0
        %v460 = vsel %vm452, %v423, 0
        %v463 = vsel %vm452, %v424, 0
        %v466 = vsel %vm452, %v425, 0
        %v469 = vsel %vm452, %v426, 0
        %v472 = vsel %vm452, %v427, 0
        %v475 = vsel %vm452, %v428, 0
        %v478 = vsel %vm452, %v429, 0
        %v481 = vsel %vm452, %v430, 0
        %v484 = vsel %vm452, %v431, 0
        %v487 = vsel %vm452, %v432, 0
        %v490 = vsel %vm452, %v433, 0
        %v493 = vsel %vm452, %v434, 0
        %v496 = vsel %vm452, %v435, 0
        %v499 = vsel %vm452, %v436, 0
        %vm501 = vcmask 1040384
        %v503 = vsel %vm501, %v448, 0
        %v506 = vsel %vm501, %v449, 0
        %508 = vmatprep.subr.bf16.mxu0 %v447
        %509 = vmatpush1.bf16.msra.mxu0 %v446
        %510 = vmatprep.subr.bf16.mxu0 %v506
        %511 = vmatpush1.bf16.msra.mxu0 %v503
        %512 = vmatprep.subr.bf16.mxu0 0
        %513 = vmatpush1.bf16.msra.mxu0 0
        %514 = vmatprep.subr.bf16.mxu0 0
        %515 = vmatpush1.bf16.msra.mxu0 0
        %516 = vmatprep.subr.bf16.mxu0 0
        %517 = vmatpush1.bf16.msra.mxu0 0
        %518 = vmatprep.subr.bf16.mxu0 0
        %519 = vmatpush1.bf16.msra.mxu0 0
        %520 = vmatprep.subr.bf16.mxu0 0
        %521 = vmatpush1.bf16.msra.mxu0 0
        %522 = vmatprep.subr.bf16.mxu0 0
        %523 = vmatpush1.bf16.msra.mxu0 0
        %524 = vmatprep.subr.bf16.mxu0 0
        %525 = vmatpush1.bf16.msra.mxu0 0
        %526 = vmatprep.subr.bf16.mxu0 0
        %527 = vmatpush1.bf16.msra.mxu0 0
        %528 = vmatprep.subr.bf16.mxu0 0
        %529 = vmatpush1.bf16.msra.mxu0 0
        %530 = vmatprep.subr.bf16.mxu0 0
        %531 = vmatpush1.bf16.msra.mxu0 0
        %532 = vmatprep.subr.bf16.mxu0 0
        %533 = vmatpush1.bf16.msra.mxu0 0
        %534 = vmatprep.subr.bf16.mxu0 0
        %535 = vmatpush1.bf16.msra.mxu0 0
        %536 = vmatprep.subr.bf16.mxu0 0
        %537 = vmatpush1.bf16.msra.mxu0 0
        %538 = vmatprep.subr.bf16.mxu0 0
        %539 = vmatpush1.bf16.msra.mxu0 0
        %540 = vmatprep.mubr.bf16.mxu0 0
        %541 = vmatmul.mubr.bf16.gmra.mrb[0].mxu0 %v454
        %v542 = vpop.f32.mrb[0].mxu0
        %v543 = vadd.f32 %v350, %v542
        %v544 = vpop.f32.mrb[0].mxu0
        %v545 = vadd.f32 %v354, %v544
        %v546 = vpop.f32.mrb[0].mxu0
        %v547 = vadd.f32 %v350, %v546
        %v548 = vpop.f32.mrb[0].mxu0
        %v549 = vadd.f32 %v354, %v548
        %550 = vmatprep.mubr.bf16.mxu0 0
        %551 = vmatmul.mubr.bf16.gmra.mrb[0].mxu0 %v457
        %v552 = vpop.f32.mrb[0].mxu0
        %v553 = vadd.f32 %v350, %v552
        %v554 = vpop.f32.mrb[0].mxu0
        %v555 = vadd.f32 %v354, %v554
        %v556 = vpop.f32.mrb[0].mxu0
        %v557 = vadd.f32 %v350, %v556
        %v558 = vpop.f32.mrb[0].mxu0
        %v559 = vadd.f32 %v354, %v558
        %560 = vmatprep.mubr.bf16.mxu0 0
        %561 = vmatmul.mubr.bf16.gmra.mrb[0].mxu0 %v460
        %v562 = vpop.f32.mrb[0].mxu0
        %v563 = vadd.f32 %v350, %v562
        %v564 = vpop.f32.mrb[0].mxu0
        %v565 = vadd.f32 %v354, %v564
        %v566 = vpop.f32.mrb[0].mxu0
        %v567 = vadd.f32 %v350, %v566
        %v568 = vpop.f32.mrb[0].mxu0
        %v569 = vadd.f32 %v354, %v568
        %570 = vmatprep.mubr.bf16.mxu0 0
        %571 = vmatmul.mubr.bf16.gmra.mrb[0].mxu0 %v463
        %v572 = vpop.f32.mrb[0].mxu0
        %v573 = vadd.f32 %v350, %v572
        %v574 = vpop.f32.mrb[0].mxu0
        %v575 = vadd.f32 %v354, %v574
        %v576 = vpop.f32.mrb[0].mxu0
        %v577 = vadd.f32 %v350, %v576
        %v578 = vpop.f32.mrb[0].mxu0
        %v579 = vadd.f32 %v354, %v578
        %580 = vmatprep.mubr.bf16.mxu0 0
        %581 = vmatmul.mubr.bf16.gmra.mrb[0].mxu0 %v466
        %v582 = vpop.f32.mrb[0].mxu0
        %v583 = vadd.f32 %v350, %v582
        %v584 = vpop.f32.mrb[0].mxu0
        %v585 = vadd.f32 %v354, %v584
        %v586 = vpop.f32.mrb[0].mxu0
        %v587 = vadd.f32 %v350, %v586
        %v588 = vpop.f32.mrb[0].mxu0
        %v589 = vadd.f32 %v354, %v588
        %590 = vmatprep.mubr.bf16.mxu0 0
        %591 = vmatmul.mubr.bf16.gmra.mrb[0].mxu0 %v469
        %v592 = vpop.f32.mrb[0].mxu0
        %v593 = vadd.f32 %v350, %v592
        %v594 = vpop.f32.mrb[0].mxu0
        %v595 = vadd.f32 %v354, %v594
        %v596 = vpop.f32.mrb[0].mxu0
        %v597 = vadd.f32 %v350, %v596
        %v598 = vpop.f32.mrb[0].mxu0
        %v599 = vadd.f32 %v354, %v598
        %600 = vmatprep.mubr.bf16.mxu0 0
        %601 = vmatmul.mubr.bf16.gmra.mrb[0].mxu0 %v472
        %v602 = vpop.f32.mrb[0].mxu0
        %v603 = vadd.f32 %v350, %v602
        %v604 = vpop.f32.mrb[0].mxu0
        %v605 = vadd.f32 %v354, %v604
        %v606 = vpop.f32.mrb[0].mxu0
        %v607 = vadd.f32 %v350, %v606
        %v608 = vpop.f32.mrb[0].mxu0
        %v609 = vadd.f32 %v354, %v608
        %610 = vmatprep.mubr.bf16.mxu0 0
        %611 = vmatmul.mubr.bf16.gmra.mrb[0].mxu0 %v475
        %v612 = vpop.f32.mrb[0].mxu0
        %v613 = vadd.f32 %v350, %v612
        %v614 = vpop.f32.mrb[0].mxu0
        %v615 = vadd.f32 %v354, %v614
        %v616 = vpop.f32.mrb[0].mxu0
        %v617 = vadd.f32 %v350, %v616
        %v618 = vpop.f32.mrb[0].mxu0
        %v619 = vadd.f32 %v354, %v618
        %620 = vmatprep.mubr.bf16.mxu0 0
        %621 = vmatmul.mubr.bf16.gmra.mrb[0].mxu0 %v478
        %v622 = vpop.f32.mrb[0].mxu0
        %v623 = vadd.f32 %v350, %v622
        %v624 = vpop.f32.mrb[0].mxu0
        %v625 = vadd.f32 %v354, %v624
        %v626 = vpop.f32.mrb[0].mxu0
        %v627 = vadd.f32 %v350, %v626
        %v628 = vpop.f32.mrb[0].mxu0
        %v629 = vadd.f32 %v354, %v628
        %630 = vmatprep.mubr.bf16.mxu0 0
        %631 = vmatmul.mubr.bf16.gmra.mrb[0].mxu0 %v481
        %v632 = vpop.f32.mrb[0].mxu0
        %v633 = vadd.f32 %v350, %v632
        %v634 = vpop.f32.mrb[0].mxu0
        %v635 = vadd.f32 %v354, %v634
        %v636 = vpop.f32.mrb[0].mxu0
        %v637 = vadd.f32 %v350, %v636
        %v638 = vpop.f32.mrb[0].mxu0
        %v639 = vadd.f32 %v354, %v638
        %640 = vmatprep.mubr.bf16.mxu0 0
        %641 = vmatmul.mubr.bf16.gmra.mrb[0].mxu0 %v484
        %v642 = vpop.f32.mrb[0].mxu0
        %v643 = vadd.f32 %v350, %v642
        %v644 = vpop.f32.mrb[0].mxu0
        %v645 = vadd.f32 %v354, %v644
        %v646 = vpop.f32.mrb[0].mxu0
        %v647 = vadd.f32 %v350, %v646
        %v648 = vpop.f32.mrb[0].mxu0
        %v649 = vadd.f32 %v354, %v648
        %650 = vmatprep.mubr.bf16.mxu0 0
        %651 = vmatmul.mubr.bf16.gmra.mrb[0].mxu0 %v487
        %v652 = vpop.f32.mrb[0].mxu0
        %v653 = vadd.f32 %v350, %v652
        %v654 = vpop.f32.mrb[0].mxu0
        %v655 = vadd.f32 %v354, %v654
        %v656 = vpop.f32.mrb[0].mxu0
        %v657 = vadd.f32 %v350, %v656
        %v658 = vpop.f32.mrb[0].mxu0
        %v659 = vadd.f32 %v354, %v658
        %660 = vmatprep.mubr.bf16.mxu0 0
        %661 = vmatmul.mubr.bf16.gmra.mrb[0].mxu0 %v490
        %v662 = vpop.f32.mrb[0].mxu0
        %v663 = vadd.f32 %v350, %v662
        %v664 = vpop.f32.mrb[0].mxu0
        %v665 = vadd.f32 %v354, %v664
        %v666 = vpop.f32.mrb[0].mxu0
        %v667 = vadd.f32 %v350, %v666
        %v668 = vpop.f32.mrb[0].mxu0
        %v669 = vadd.f32 %v354, %v668
        %670 = vmatprep.mubr.bf16.mxu0 0
        %671 = vmatmul.mubr.bf16.gmra.mrb[0].mxu0 %v493
        %v672 = vpop.f32.mrb[0].mxu0
        %v673 = vadd.f32 %v350, %v672
        %v674 = vpop.f32.mrb[0].mxu0
        %v675 = vadd.f32 %v354, %v674
        %v676 = vpop.f32.mrb[0].mxu0
        %v677 = vadd.f32 %v350, %v676
        %v678 = vpop.f32.mrb[0].mxu0
        %v679 = vadd.f32 %v354, %v678
        %680 = vmatprep.mubr.bf16.mxu0 0
        %681 = vmatmul.mubr.bf16.gmra.mrb[0].mxu0 %v496
        %v682 = vpop.f32.mrb[0].mxu0
        %v683 = vadd.f32 %v350, %v682
        %v684 = vpop.f32.mrb[0].mxu0
        %v685 = vadd.f32 %v354, %v684
        %v686 = vpop.f32.mrb[0].mxu0
        %v687 = vadd.f32 %v350, %v686
        %v688 = vpop.f32.mrb[0].mxu0
        %v689 = vadd.f32 %v354, %v688
        %690 = vmatprep.mubr.bf16.mxu0 0
        %691 = vmatmul.mubr.bf16.gmra.mrb[0].mxu0 %v499
        %v692 = vpop.f32.mrb[0].mxu0
        %v693 = vadd.f32 %v350, %v692
        %v694 = vpop.f32.mrb[0].mxu0
        %v695 = vadd.f32 %v354, %v694
        %v696 = vpop.f32.mrb[0].mxu0
        %v697 = vadd.f32 %v350, %v696
        %v698 = vpop.f32.mrb[0].mxu0
        %v699 = vadd.f32 %v354, %v698
        %700 = vdwg.mxu0
        %v701 = vmax.f32 %v543, 0.0
        %v702 = vmax.f32 %v545, 0.0
        %v703 = vmax.f32 %v547, 0.0
        %v704 = vmax.f32 %v549, 0.0
        %v705 = vmax.f32 %v553, 0.0
        %v706 = vmax.f32 %v555, 0.0
        %v707 = vmax.f32 %v557, 0.0
        %v708 = vmax.f32 %v559, 0.0
        %v709 = vmax.f32 %v563, 0.0
        %v710 = vmax.f32 %v565, 0.0
        %v711 = vmax.f32 %v567, 0.0
        %v712 = vmax.f32 %v569, 0.0
        %v713 = vmax.f32 %v573, 0.0
        %v714 = vmax.f32 %v575, 0.0
        %v715 = vmax.f32 %v577, 0.0
        %v716 = vmax.f32 %v579, 0.0
        %v717 = vmax.f32 %v583, 0.0
        %v718 = vmax.f32 %v585, 0.0
        %v719 = vmax.f32 %v587, 0.0
        %v720 = vmax.f32 %v589, 0.0
        %v721 = vmax.f32 %v593, 0.0
        %v722 = vmax.f32 %v595, 0.0
        %v723 = vmax.f32 %v597, 0.0
        %v724 = vmax.f32 %v599, 0.0
        %v725 = vmax.f32 %v603, 0.0
        %v726 = vmax.f32 %v605, 0.0
        %v727 = vmax.f32 %v607, 0.0
        %v728 = vmax.f32 %v609, 0.0
        %v729 = vmax.f32 %v613, 0.0
        %v730 = vmax.f32 %v615, 0.0
        %v731 = vmax.f32 %v617, 0.0
        %v732 = vmax.f32 %v619, 0.0
        %v733 = vmax.f32 %v623, 0.0
        %v734 = vmax.f32 %v625, 0.0
        %v735 = vmax.f32 %v627, 0.0
        %v736 = vmax.f32 %v629, 0.0
        %v737 = vmax.f32 %v633, 0.0
        %v738 = vmax.f32 %v635, 0.0
        %v739 = vmax.f32 %v637, 0.0
        %v740 = vmax.f32 %v639, 0.0
        %v741 = vmax.f32 %v643, 0.0
        %v742 = vmax.f32 %v645, 0.0
        %v743 = vmax.f32 %v647, 0.0
        %v744 = vmax.f32 %v649, 0.0
        %v745 = vmax.f32 %v653, 0.0
        %v746 = vmax.f32 %v655, 0.0
        %v747 = vmax.f32 %v657, 0.0
        %v748 = vmax.f32 %v659, 0.0
        %v749 = vmax.f32 %v663, 0.0
        %v750 = vmax.f32 %v665, 0.0
        %v751 = vmax.f32 %v667, 0.0
        %v752 = vmax.f32 %v669, 0.0
        %v753 = vmax.f32 %v673, 0.0
        %v754 = vmax.f32 %v675, 0.0
        %v755 = vmax.f32 %v677, 0.0
        %v756 = vmax.f32 %v679, 0.0
        %v757 = vmax.f32 %v683, 0.0
        %v758 = vmax.f32 %v685, 0.0
        %v759 = vmax.f32 %v687, 0.0
        %v760 = vmax.f32 %v689, 0.0
        %v761 = vmax.f32 %v693, 0.0
        %v762 = vmax.f32 %v695, 0.0
        %v763 = vmax.f32 %v697, 0.0
        %v764 = vmax.f32 %v699, 0.0
        %v765 = vpack.c.bf16 %v703, %v701
        %v766 = vpack.c.bf16 %v704, %v702
        %v767 = vpack.c.bf16 %v707, %v705
        %v768 = vpack.c.bf16 %v708, %v706
        %v769 = vpack.c.bf16 %v711, %v709
        %v770 = vpack.c.bf16 %v712, %v710
        %v771 = vpack.c.bf16 %v715, %v713
        %v772 = vpack.c.bf16 %v716, %v714
        %v773 = vpack.c.bf16 %v719, %v717
        %v774 = vpack.c.bf16 %v720, %v718
        %v775 = vpack.c.bf16 %v723, %v721
        %v776 = vpack.c.bf16 %v724, %v722
        %v777 = vpack.c.bf16 %v727, %v725
        %v778 = vpack.c.bf16 %v728, %v726
        %v779 = vpack.c.bf16 %v731, %v729
        %v780 = vpack.c.bf16 %v732, %v730
        %v781 = vpack.c.bf16 %v735, %v733
        %v782 = vpack.c.bf16 %v736, %v734
        %v783 = vpack.c.bf16 %v739, %v737
        %v784 = vpack.c.bf16 %v740, %v738
        %v785 = vpack.c.bf16 %v743, %v741
        %v786 = vpack.c.bf16 %v744, %v742
        %v787 = vpack.c.bf16 %v747, %v745
        %v788 = vpack.c.bf16 %v748, %v746
        %v789 = vpack.c.bf16 %v751, %v749
        %v790 = vpack.c.bf16 %v752, %v750
        %v791 = vpack.c.bf16 %v755, %v753
        %v792 = vpack.c.bf16 %v756, %v754
        %v793 = vpack.c.bf16 %v759, %v757
        %v794 = vpack.c.bf16 %v760, %v758
        %v795 = vpack.c.bf16 %v763, %v761
        %v796 = vpack.c.bf16 %v764, %v762
        %v797 = vld [vmem:[%s3] sm:$0xf]
        %v798 = vld [vmem:[%s3 + $0x4] sm:$0xf]
        %v799 = vld [vmem:[%s3 + $0x8] sm:$0xf]
        %v800 = vld [vmem:[%s3 + $0xc] sm:$0xf]
        %v801 = vld [vmem:[%s3 + $0x10] sm:$0xf]
        %v802 = vld [vmem:[%s3 + $0x14] sm:$0xf]
        %v803 = vld [vmem:[%s3 + $0x18] sm:$0xf]
        %v804 = vld [vmem:[%s3 + $0x1c] sm:$0xf]
        %v805 = vld [vmem:[%s3 + $0x20] sm:$0xf]
        %v806 = vld [vmem:[%s3 + $0x24] sm:$0xf]
        %v807 = vld [vmem:[%s3 + $0x28] sm:$0xf]
        %v808 = vld [vmem:[%s3 + $0x2c] sm:$0xf]
        %v809 = vld [vmem:[%s3 + $0x30] sm:$0xf]
        %v810 = vld [vmem:[%s3 + $0x34] sm:$0xf]
        %v811 = vld [vmem:[%s3 + $0x38] sm:$0xf]
        %v812 = vld [vmem:[%s3 + $0x3c] sm:$0xf]
        %v813 = vld [vmem:[%s3 + $0x40] sm:$0xf]
        %v814 = vld [vmem:[%s3 + $0x44] sm:$0xf]
        %v815 = vld [vmem:[%s3 + $0x48] sm:$0xf]
        %v816 = vld [vmem:[%s3 + $0x4c] sm:$0xf]
        %v817 = vld [vmem:[%s3 + $0x50] sm:$0xf]
        %v818 = vld [vmem:[%s3 + $0x54] sm:$0xf]
        %v819 = vld [vmem:[%s3 + $0x58] sm:$0xf]
        %v820 = vld [vmem:[%s3 + $0x5c] sm:$0xf]
        %v821 = vld [vmem:[%s3 + $0x60] sm:$0xf]
        %v822 = vld [vmem:[%s3 + $0x64] sm:$0xf]
        %v823 = vld [vmem:[%s3 + $0x68] sm:$0xf]
        %v824 = vld [vmem:[%s3 + $0x6c] sm:$0xf]
        %v825 = vld [vmem:[%s3 + $0x70] sm:$0xf]
        %v826 = vld [vmem:[%s3 + $0x74] sm:$0xf]
        %v827 = vld [vmem:[%s3 + $0x78] sm:$0xf]
        %v828 = vld [vmem:[%s3 + $0x7c] sm:$0xf]
        %v829 = vld [vmem:[%s4] sm:$0x1]
        %v831 = vlaneseq
        %v832 = vshrl.u32 %v831, 7
        %v833 = vsub.s32 0, %v832
        %v834 = vrot.slane %v829, %v833
        %v868 = vunpack.c.l.b16 %v797
        %v869 = vunpack.c.l.b16 %v798
        %v870 = vunpack.c.l.b16 %v799
        %v871 = vunpack.c.l.b16 %v800
        %v872 = vunpack.c.l.b16 %v801
        %v873 = vunpack.c.l.b16 %v802
        %v874 = vunpack.c.l.b16 %v803
        %v875 = vunpack.c.l.b16 %v804
        %v876 = vunpack.c.l.b16 %v805
        %v877 = vunpack.c.l.b16 %v806
        %v878 = vunpack.c.l.b16 %v807
        %v879 = vunpack.c.l.b16 %v808
        %v880 = vunpack.c.l.b16 %v809
        %v881 = vunpack.c.l.b16 %v810
        %v882 = vunpack.c.l.b16 %v811
        %v883 = vunpack.c.l.b16 %v812
        %v884 = vunpack.c.l.b16 %v813
        %v885 = vunpack.c.l.b16 %v814
        %v886 = vunpack.c.l.b16 %v815
        %v887 = vunpack.c.l.b16 %v816
        %v888 = vunpack.c.l.b16 %v817
        %v889 = vunpack.c.l.b16 %v818
        %v890 = vunpack.c.l.b16 %v819
        %v891 = vunpack.c.l.b16 %v820
        %v892 = vunpack.c.l.b16 %v821
        %v893 = vunpack.c.l.b16 %v822
        %v894 = vunpack.c.l.b16 %v823
        %v895 = vunpack.c.l.b16 %v824
        %v896 = vunpack.c.l.b16 %v825
        %v897 = vunpack.c.l.b16 %v826
        %v898 = vunpack.c.l.b16 %v827
        %v899 = vunpack.c.l.b16 %v828
        %v900 = vpack.c.b16 %v869, %v868
        %v901 = vpack.c.b16 %v871, %v870
        %v902 = vpack.c.b16 %v873, %v872
        %v903 = vpack.c.b16 %v875, %v874
        %v904 = vpack.c.b16 %v877, %v876
        %v905 = vpack.c.b16 %v879, %v878
        %v906 = vpack.c.b16 %v881, %v880
        %v907 = vpack.c.b16 %v883, %v882
        %v908 = vpack.c.b16 %v885, %v884
        %v909 = vpack.c.b16 %v887, %v886
        %v910 = vpack.c.b16 %v889, %v888
        %v911 = vpack.c.b16 %v891, %v890
        %v912 = vpack.c.b16 %v893, %v892
        %v913 = vpack.c.b16 %v895, %v894
        %v914 = vpack.c.b16 %v897, %v896
        %v915 = vpack.c.b16 %v899, %v898
        %932 = vmatprep.subr.bf16.mxu0 0
        %933 = vmatpush1.bf16.msra.mxu0 %v900
        %934 = vmatprep.subr.bf16.mxu0 0
        %935 = vmatpush1.bf16.msra.mxu0 %v901
        %936 = vmatprep.subr.bf16.mxu0 0
        %937 = vmatpush1.bf16.msra.mxu0 %v902
        %938 = vmatprep.subr.bf16.mxu0 0
        %939 = vmatpush1.bf16.msra.mxu0 %v903
        %940 = vmatprep.subr.bf16.mxu0 0
        %941 = vmatpush1.bf16.msra.mxu0 %v904
        %942 = vmatprep.subr.bf16.mxu0 0
        %943 = vmatpush1.bf16.msra.mxu0 %v905
        %944 = vmatprep.subr.bf16.mxu0 0
        %945 = vmatpush1.bf16.msra.mxu0 %v906
        %946 = vmatprep.subr.bf16.mxu0 0
        %947 = vmatpush1.bf16.msra.mxu0 %v907
        %948 = vmatprep.subr.bf16.mxu0 0
        %949 = vmatpush1.bf16.msra.mxu0 %v908
        %950 = vmatprep.subr.bf16.mxu0 0
        %951 = vmatpush1.bf16.msra.mxu0 %v909
        %952 = vmatprep.subr.bf16.mxu0 0
        %953 = vmatpush1.bf16.msra.mxu0 %v910
        %954 = vmatprep.subr.bf16.mxu0 0
        %955 = vmatpush1.bf16.msra.mxu0 %v911
        %956 = vmatprep.subr.bf16.mxu0 0
        %957 = vmatpush1.bf16.msra.mxu0 %v912
        %958 = vmatprep.subr.bf16.mxu0 0
        %959 = vmatpush1.bf16.msra.mxu0 %v913
        %960 = vmatprep.subr.bf16.mxu0 0
        %961 = vmatpush1.bf16.msra.mxu0 %v914
        %962 = vmatprep.subr.bf16.mxu0 0
        %963 = vmatpush1.bf16.msra.mxu0 %v915
        %964 = vmatprep.mubr.bf16.mxu0 %v766
        %965 = vmatmul.mubr.bf16.gmra.mrb[0].mxu0 %v765
        %v966 = vpop.f32.mrb[0].mxu0
        %v967 = vadd.f32 %v834, %v966
        %v968 = vpop.f32.mrb[0].mxu0
        %v969 = vpop.f32.mrb[0].mxu0
        %v970 = vadd.f32 %v834, %v969
        %v971 = vpop.f32.mrb[0].mxu0
        %972 = vmatprep.mubr.bf16.mxu0 %v768
        %973 = vmatmul.mubr.bf16.gmra.mrb[0].mxu0 %v767
        %v974 = vpop.f32.mrb[0].mxu0
        %v975 = vadd.f32 %v834, %v974
        %v976 = vpop.f32.mrb[0].mxu0
        %v977 = vpop.f32.mrb[0].mxu0
        %v978 = vadd.f32 %v834, %v977
        %v979 = vpop.f32.mrb[0].mxu0
        %980 = vmatprep.mubr.bf16.mxu0 %v770
        %981 = vmatmul.mubr.bf16.gmra.mrb[0].mxu0 %v769
        %v982 = vpop.f32.mrb[0].mxu0
        %v983 = vadd.f32 %v834, %v982
        %v984 = vpop.f32.mrb[0].mxu0
        %v985 = vpop.f32.mrb[0].mxu0
        %v986 = vadd.f32 %v834, %v985
        %v987 = vpop.f32.mrb[0].mxu0
        %988 = vmatprep.mubr.bf16.mxu0 %v772
        %989 = vmatmul.mubr.bf16.gmra.mrb[0].mxu0 %v771
        %v990 = vpop.f32.mrb[0].mxu0
        %v991 = vadd.f32 %v834, %v990
        %v992 = vpop.f32.mrb[0].mxu0
        %v993 = vpop.f32.mrb[0].mxu0
        %v994 = vadd.f32 %v834, %v993
        %v995 = vpop.f32.mrb[0].mxu0
        %996 = vmatprep.mubr.bf16.mxu0 %v774
        %997 = vmatmul.mubr.bf16.gmra.mrb[0].mxu0 %v773
        %v998 = vpop.f32.mrb[0].mxu0
        %v999 = vadd.f32 %v834, %v998
        %v1000 = vpop.f32.mrb[0].mxu0
        %v1001 = vpop.f32.mrb[0].mxu0
        %v1002 = vadd.f32 %v834, %v1001
        %v1003 = vpop.f32.mrb[0].mxu0
        %1004 = vmatprep.mubr.bf16.mxu0 %v776
        %1005 = vmatmul.mubr.bf16.gmra.mrb[0].mxu0 %v775
        %v1006 = vpop.f32.mrb[0].mxu0
        %v1007 = vadd.f32 %v834, %v1006
        %v1008 = vpop.f32.mrb[0].mxu0
        %v1009 = vpop.f32.mrb[0].mxu0
        %v1010 = vadd.f32 %v834, %v1009
        %v1011 = vpop.f32.mrb[0].mxu0
        %1012 = vmatprep.mubr.bf16.mxu0 %v778
        %1013 = vmatmul.mubr.bf16.gmra.mrb[0].mxu0 %v777
        %v1014 = vpop.f32.mrb[0].mxu0
        %v1015 = vadd.f32 %v834, %v1014
        %v1016 = vpop.f32.mrb[0].mxu0
        %v1017 = vpop.f32.mrb[0].mxu0
        %v1018 = vadd.f32 %v834, %v1017
        %v1019 = vpop.f32.mrb[0].mxu0
        %1020 = vmatprep.mubr.bf16.mxu0 %v780
        %1021 = vmatmul.mubr.bf16.gmra.mrb[0].mxu0 %v779
        %v1022 = vpop.f32.mrb[0].mxu0
        %v1023 = vadd.f32 %v834, %v1022
        %v1024 = vpop.f32.mrb[0].mxu0
        %v1025 = vpop.f32.mrb[0].mxu0
        %v1026 = vadd.f32 %v834, %v1025
        %v1027 = vpop.f32.mrb[0].mxu0
        %1028 = vmatprep.mubr.bf16.mxu0 %v782
        %1029 = vmatmul.mubr.bf16.gmra.mrb[0].mxu0 %v781
        %v1030 = vpop.f32.mrb[0].mxu0
        %v1031 = vadd.f32 %v834, %v1030
        %v1032 = vpop.f32.mrb[0].mxu0
        %v1033 = vpop.f32.mrb[0].mxu0
        %v1034 = vadd.f32 %v834, %v1033
        %v1035 = vpop.f32.mrb[0].mxu0
        %1036 = vmatprep.mubr.bf16.mxu0 %v784
        %1037 = vmatmul.mubr.bf16.gmra.mrb[0].mxu0 %v783
        %v1038 = vpop.f32.mrb[0].mxu0
        %v1039 = vadd.f32 %v834, %v1038
        %v1040 = vpop.f32.mrb[0].mxu0
        %v1041 = vpop.f32.mrb[0].mxu0
        %v1042 = vadd.f32 %v834, %v1041
        %v1043 = vpop.f32.mrb[0].mxu0
        %1044 = vmatprep.mubr.bf16.mxu0 %v786
        %1045 = vmatmul.mubr.bf16.gmra.mrb[0].mxu0 %v785
        %v1046 = vpop.f32.mrb[0].mxu0
        %v1047 = vadd.f32 %v834, %v1046
        %v1048 = vpop.f32.mrb[0].mxu0
        %v1049 = vpop.f32.mrb[0].mxu0
        %v1050 = vadd.f32 %v834, %v1049
        %v1051 = vpop.f32.mrb[0].mxu0
        %1052 = vmatprep.mubr.bf16.mxu0 %v788
        %1053 = vmatmul.mubr.bf16.gmra.mrb[0].mxu0 %v787
        %v1054 = vpop.f32.mrb[0].mxu0
        %v1055 = vadd.f32 %v834, %v1054
        %v1056 = vpop.f32.mrb[0].mxu0
        %v1057 = vpop.f32.mrb[0].mxu0
        %v1058 = vadd.f32 %v834, %v1057
        %v1059 = vpop.f32.mrb[0].mxu0
        %1060 = vmatprep.mubr.bf16.mxu0 %v790
        %1061 = vmatmul.mubr.bf16.gmra.mrb[0].mxu0 %v789
        %v1062 = vpop.f32.mrb[0].mxu0
        %v1063 = vadd.f32 %v834, %v1062
        %v1064 = vpop.f32.mrb[0].mxu0
        %v1065 = vpop.f32.mrb[0].mxu0
        %v1066 = vadd.f32 %v834, %v1065
        %v1067 = vpop.f32.mrb[0].mxu0
        %1068 = vmatprep.mubr.bf16.mxu0 %v792
        %1069 = vmatmul.mubr.bf16.gmra.mrb[0].mxu0 %v791
        %v1070 = vpop.f32.mrb[0].mxu0
        %v1071 = vadd.f32 %v834, %v1070
        %v1072 = vpop.f32.mrb[0].mxu0
        %v1073 = vpop.f32.mrb[0].mxu0
        %v1074 = vadd.f32 %v834, %v1073
        %v1075 = vpop.f32.mrb[0].mxu0
        %1076 = vmatprep.mubr.bf16.mxu0 %v794
        %1077 = vmatmul.mubr.bf16.gmra.mrb[0].mxu0 %v793
        %v1078 = vpop.f32.mrb[0].mxu0
        %v1079 = vadd.f32 %v834, %v1078
        %v1080 = vpop.f32.mrb[0].mxu0
        %v1081 = vpop.f32.mrb[0].mxu0
        %v1082 = vadd.f32 %v834, %v1081
        %v1083 = vpop.f32.mrb[0].mxu0
        %1084 = vmatprep.mubr.bf16.mxu0 %v796
        %1085 = vmatmul.mubr.bf16.gmra.mrb[0].mxu0 %v795
        %v1086 = vpop.f32.mrb[0].mxu0
        %v1087 = vadd.f32 %v834, %v1086
        %v1088 = vpop.f32.mrb[0].mxu0
        %v1089 = vpop.f32.mrb[0].mxu0
        %v1090 = vadd.f32 %v834, %v1089
        %v1091 = vpop.f32.mrb[0].mxu0
        %1092 = vdwg.mxu0
        %v1093 = vunpack.c.l.bf16 %v310
        %v1094 = vunpack.c.l.bf16 %v311
        %v1095 = vunpack.c.l.bf16 %v312
        %v1096 = vunpack.c.l.bf16 %v313
        %v1097 = vunpack.c.l.bf16 %v314
        %v1098 = vunpack.c.l.bf16 %v315
        %v1099 = vunpack.c.l.bf16 %v316
        %v1100 = vunpack.c.l.bf16 %v317
        %v1101 = vunpack.c.l.bf16 %v318
        %v1102 = vunpack.c.l.bf16 %v319
        %v1103 = vunpack.c.l.bf16 %v320
        %v1104 = vunpack.c.l.bf16 %v321
        %v1105 = vunpack.c.l.bf16 %v322
        %v1106 = vunpack.c.l.bf16 %v323
        %v1107 = vunpack.c.l.bf16 %v324
        %v1108 = vunpack.c.l.bf16 %v325
        %v1109 = vunpack.c.l.bf16 %v326
        %v1110 = vunpack.c.l.bf16 %v327
        %v1111 = vunpack.c.l.bf16 %v328
        %v1112 = vunpack.c.l.bf16 %v329
        %v1113 = vunpack.c.l.bf16 %v330
        %v1114 = vunpack.c.l.bf16 %v331
        %v1115 = vunpack.c.l.bf16 %v332
        %v1116 = vunpack.c.l.bf16 %v333
        %v1117 = vunpack.c.l.bf16 %v334
        %v1118 = vunpack.c.l.bf16 %v335
        %v1119 = vunpack.c.l.bf16 %v336
        %v1120 = vunpack.c.l.bf16 %v337
        %v1121 = vunpack.c.l.bf16 %v338
        %v1122 = vunpack.c.l.bf16 %v339
        %v1123 = vunpack.c.l.bf16 %v340
        %v1124 = vunpack.c.l.bf16 %v341
        %v1125 = vld [vmem:[%s5] sm:$0x1]
        %1127 = vset.pattern.permute.xlu0 16
        %1128 = vperm.xlu0 %1127, %v1093
        %v1129 = vpop.permute.xlu0 %1128
        %1132 = vset.pattern.permute.xlu0 16
        %1133 = vperm.xlu0 %1132, %v1094
        %v1134 = vpop.permute.xlu0 %1133
        %1137 = vset.pattern.permute.xlu0 16
        %1138 = vperm.xlu0 %1137, %v1095
        %v1139 = vpop.permute.xlu0 %1138
        %1142 = vset.pattern.permute.xlu0 16
        %1143 = vperm.xlu0 %1142, %v1096
        %v1144 = vpop.permute.xlu0 %1143
        %1147 = vset.pattern.permute.xlu0 16
        %1148 = vperm.xlu0 %1147, %v1097
        %v1149 = vpop.permute.xlu0 %1148
        %1152 = vset.pattern.permute.xlu0 16
        %1153 = vperm.xlu0 %1152, %v1098
        %v1154 = vpop.permute.xlu0 %1153
        %1157 = vset.pattern.permute.xlu0 16
        %1158 = vperm.xlu0 %1157, %v1099
        %v1159 = vpop.permute.xlu0 %1158
        %1162 = vset.pattern.permute.xlu0 16
        %1163 = vperm.xlu0 %1162, %v1100
        %v1164 = vpop.permute.xlu0 %1163
        %1167 = vset.pattern.permute.xlu0 16
        %1168 = vperm.xlu0 %1167, %v1101
        %v1169 = vpop.permute.xlu0 %1168
        %1172 = vset.pattern.permute.xlu0 16
        %1173 = vperm.xlu0 %1172, %v1102
        %v1174 = vpop.permute.xlu0 %1173
        %1177 = vset.pattern.permute.xlu0 16
        %1178 = vperm.xlu0 %1177, %v1103
        %v1179 = vpop.permute.xlu0 %1178
        %1182 = vset.pattern.permute.xlu0 16
        %1183 = vperm.xlu0 %1182, %v1104
        %v1184 = vpop.permute.xlu0 %1183
        %1187 = vset.pattern.permute.xlu0 16
        %1188 = vperm.xlu0 %1187, %v1105
        %v1189 = vpop.permute.xlu0 %1188
        %1192 = vset.pattern.permute.xlu0 16
        %1193 = vperm.xlu0 %1192, %v1106
        %v1194 = vpop.permute.xlu0 %1193
        %1197 = vset.pattern.permute.xlu0 16
        %1198 = vperm.xlu0 %1197, %v1107
        %v1199 = vpop.permute.xlu0 %1198
        %1202 = vset.pattern.permute.xlu0 16
        %1203 = vperm.xlu0 %1202, %v1108
        %v1204 = vpop.permute.xlu0 %1203
        %1207 = vset.pattern.permute.xlu0 16
        %1208 = vperm.xlu0 %1207, %v1109
        %v1209 = vpop.permute.xlu0 %1208
        %1212 = vset.pattern.permute.xlu0 16
        %1213 = vperm.xlu0 %1212, %v1110
        %v1214 = vpop.permute.xlu0 %1213
        %1217 = vset.pattern.permute.xlu0 16
        %1218 = vperm.xlu0 %1217, %v1111
        %v1219 = vpop.permute.xlu0 %1218
        %1222 = vset.pattern.permute.xlu0 16
        %1223 = vperm.xlu0 %1222, %v1112
        %v1224 = vpop.permute.xlu0 %1223
        %1227 = vset.pattern.permute.xlu0 16
        %1228 = vperm.xlu0 %1227, %v1113
        %v1229 = vpop.permute.xlu0 %1228
        %1232 = vset.pattern.permute.xlu0 16
        %1233 = vperm.xlu0 %1232, %v1114
        %v1234 = vpop.permute.xlu0 %1233
        %1237 = vset.pattern.permute.xlu0 16
        %1238 = vperm.xlu0 %1237, %v1115
        %v1239 = vpop.permute.xlu0 %1238
        %1242 = vset.pattern.permute.xlu0 16
        %1243 = vperm.xlu0 %1242, %v1116
        %v1244 = vpop.permute.xlu0 %1243
        %1247 = vset.pattern.permute.xlu0 16
        %1248 = vperm.xlu0 %1247, %v1117
        %v1249 = vpop.permute.xlu0 %1248
        %1252 = vset.pattern.permute.xlu0 16
        %1253 = vperm.xlu0 %1252, %v1118
        %v1254 = vpop.permute.xlu0 %1253
        %1257 = vset.pattern.permute.xlu0 16
        %1258 = vperm.xlu0 %1257, %v1119
        %v1259 = vpop.permute.xlu0 %1258
        %1262 = vset.pattern.permute.xlu0 16
        %1263 = vperm.xlu0 %1262, %v1120
        %v1264 = vpop.permute.xlu0 %1263
        %1267 = vset.pattern.permute.xlu0 16
        %1268 = vperm.xlu0 %1267, %v1121
        %v1269 = vpop.permute.xlu0 %1268
        %1272 = vset.pattern.permute.xlu0 16
        %1273 = vperm.xlu0 %1272, %v1122
        %v1274 = vpop.permute.xlu0 %1273
        %1277 = vset.pattern.permute.xlu0 16
        %1278 = vperm.xlu0 %1277, %v1123
        %v1279 = vpop.permute.xlu0 %1278
        %1282 = vset.pattern.permute.xlu0 16
        %1283 = vperm.xlu0 %1282, %v1124
        %v1284 = vpop.permute.xlu0 %1283
        %v1286 = vlaneseq
        %v1287 = vshrl.u32 %v1286, 7
        %v1288 = vsub.s32 0, %v1287
        %v1289 = vrot.slane %v1125, %v1288
        %v1290 = vmul.f32 %v1129, %v1289
        %v1291 = vmul.f32 %v1134, %v1289
        %v1292 = vmul.f32 %v1139, %v1289
        %v1293 = vmul.f32 %v1144, %v1289
        %v1294 = vmul.f32 %v1149, %v1289
        %v1295 = vmul.f32 %v1154, %v1289
        %v1296 = vmul.f32 %v1159, %v1289
        %v1297 = vmul.f32 %v1164, %v1289
        %v1298 = vmul.f32 %v1169, %v1289
        %v1299 = vmul.f32 %v1174, %v1289
        %v1300 = vmul.f32 %v1179, %v1289
        %v1301 = vmul.f32 %v1184, %v1289
        %v1302 = vmul.f32 %v1189, %v1289
        %v1303 = vmul.f32 %v1194, %v1289
        %v1304 = vmul.f32 %v1199, %v1289
        %v1305 = vmul.f32 %v1204, %v1289
        %v1306 = vmul.f32 %v1209, %v1289
        %v1307 = vmul.f32 %v1214, %v1289
        %v1308 = vmul.f32 %v1219, %v1289
        %v1309 = vmul.f32 %v1224, %v1289
        %v1310 = vmul.f32 %v1229, %v1289
        %v1311 = vmul.f32 %v1234, %v1289
        %v1312 = vmul.f32 %v1239, %v1289
        %v1313 = vmul.f32 %v1244, %v1289
        %v1314 = vmul.f32 %v1249, %v1289
        %v1315 = vmul.f32 %v1254, %v1289
        %v1316 = vmul.f32 %v1259, %v1289
        %v1317 = vmul.f32 %v1264, %v1289
        %v1318 = vmul.f32 %v1269, %v1289
        %v1319 = vmul.f32 %v1274, %v1289
        %v1320 = vmul.f32 %v1279, %v1289
        %v1321 = vmul.f32 %v1284, %v1289
        %v1322 = vadd.f32 %v967, %v1290
        %v1323 = vadd.f32 %v970, %v1291
        %v1324 = vadd.f32 %v975, %v1292
        %v1325 = vadd.f32 %v978, %v1293
        %v1326 = vadd.f32 %v983, %v1294
        %v1327 = vadd.f32 %v986, %v1295
        %v1328 = vadd.f32 %v991, %v1296
        %v1329 = vadd.f32 %v994, %v1297
        %v1330 = vadd.f32 %v999, %v1298
        %v1331 = vadd.f32 %v1002, %v1299
        %v1332 = vadd.f32 %v1007, %v1300
        %v1333 = vadd.f32 %v1010, %v1301
        %v1334 = vadd.f32 %v1015, %v1302
        %v1335 = vadd.f32 %v1018, %v1303
        %v1336 = vadd.f32 %v1023, %v1304
        %v1337 = vadd.f32 %v1026, %v1305
        %v1338 = vadd.f32 %v1031, %v1306
        %v1339 = vadd.f32 %v1034, %v1307
        %v1340 = vadd.f32 %v1039, %v1308
        %v1341 = vadd.f32 %v1042, %v1309
        %v1342 = vadd.f32 %v1047, %v1310
        %v1343 = vadd.f32 %v1050, %v1311
        %v1344 = vadd.f32 %v1055, %v1312
        %v1345 = vadd.f32 %v1058, %v1313
        %v1346 = vadd.f32 %v1063, %v1314
        %v1347 = vadd.f32 %v1066, %v1315
        %v1348 = vadd.f32 %v1071, %v1316
        %v1349 = vadd.f32 %v1074, %v1317
        %v1350 = vadd.f32 %v1079, %v1318
        %v1351 = vadd.f32 %v1082, %v1319
        %v1352 = vadd.f32 %v1087, %v1320
        %v1353 = vadd.f32 %v1090, %v1321
        %v1354 = vld [vmem:[%s5 + $0x1] sm:$0x1]
        %1355 = vset.pattern.permute.xlu0 17
        %1356 = vperm.xlu0 %1355, %v1093
        %v1357 = vpop.permute.xlu0 %1356
        %1359 = vset.pattern.permute.xlu0 17
        %1360 = vperm.xlu0 %1359, %v1094
        %v1361 = vpop.permute.xlu0 %1360
        %1363 = vset.pattern.permute.xlu0 17
        %1364 = vperm.xlu0 %1363, %v1095
        %v1365 = vpop.permute.xlu0 %1364
        %1367 = vset.pattern.permute.xlu0 17
        %1368 = vperm.xlu0 %1367, %v1096
        %v1369 = vpop.permute.xlu0 %1368
        %1371 = vset.pattern.permute.xlu0 17
        %1372 = vperm.xlu0 %1371, %v1097
        %v1373 = vpop.permute.xlu0 %1372
        %1375 = vset.pattern.permute.xlu0 17
        %1376 = vperm.xlu0 %1375, %v1098
        %v1377 = vpop.permute.xlu0 %1376
        %1379 = vset.pattern.permute.xlu0 17
        %1380 = vperm.xlu0 %1379, %v1099
        %v1381 = vpop.permute.xlu0 %1380
        %1383 = vset.pattern.permute.xlu0 17
        %1384 = vperm.xlu0 %1383, %v1100
        %v1385 = vpop.permute.xlu0 %1384
        %1387 = vset.pattern.permute.xlu0 17
        %1388 = vperm.xlu0 %1387, %v1101
        %v1389 = vpop.permute.xlu0 %1388
        %1391 = vset.pattern.permute.xlu0 17
        %1392 = vperm.xlu0 %1391, %v1102
        %v1393 = vpop.permute.xlu0 %1392
        %1395 = vset.pattern.permute.xlu0 17
        %1396 = vperm.xlu0 %1395, %v1103
        %v1397 = vpop.permute.xlu0 %1396
        %1399 = vset.pattern.permute.xlu0 17
        %1400 = vperm.xlu0 %1399, %v1104
        %v1401 = vpop.permute.xlu0 %1400
        %1403 = vset.pattern.permute.xlu0 17
        %1404 = vperm.xlu0 %1403, %v1105
        %v1405 = vpop.permute.xlu0 %1404
        %1407 = vset.pattern.permute.xlu0 17
        %1408 = vperm.xlu0 %1407, %v1106
        %v1409 = vpop.permute.xlu0 %1408
        %1411 = vset.pattern.permute.xlu0 17
        %1412 = vperm.xlu0 %1411, %v1107
        %v1413 = vpop.permute.xlu0 %1412
        %1415 = vset.pattern.permute.xlu0 17
        %1416 = vperm.xlu0 %1415, %v1108
        %v1417 = vpop.permute.xlu0 %1416
        %1419 = vset.pattern.permute.xlu0 17
        %1420 = vperm.xlu0 %1419, %v1109
        %v1421 = vpop.permute.xlu0 %1420
        %1423 = vset.pattern.permute.xlu0 17
        %1424 = vperm.xlu0 %1423, %v1110
        %v1425 = vpop.permute.xlu0 %1424
        %1427 = vset.pattern.permute.xlu0 17
        %1428 = vperm.xlu0 %1427, %v1111
        %v1429 = vpop.permute.xlu0 %1428
        %1431 = vset.pattern.permute.xlu0 17
        %1432 = vperm.xlu0 %1431, %v1112
        %v1433 = vpop.permute.xlu0 %1432
        %1435 = vset.pattern.permute.xlu0 17
        %1436 = vperm.xlu0 %1435, %v1113
        %v1437 = vpop.permute.xlu0 %1436
        %1439 = vset.pattern.permute.xlu0 17
        %1440 = vperm.xlu0 %1439, %v1114
        %v1441 = vpop.permute.xlu0 %1440
        %1443 = vset.pattern.permute.xlu0 17
        %1444 = vperm.xlu0 %1443, %v1115
        %v1445 = vpop.permute.xlu0 %1444
        %1447 = vset.pattern.permute.xlu0 17
        %1448 = vperm.xlu0 %1447, %v1116
        %v1449 = vpop.permute.xlu0 %1448
        %1451 = vset.pattern.permute.xlu0 17
        %1452 = vperm.xlu0 %1451, %v1117
        %v1453 = vpop.permute.xlu0 %1452
        %1455 = vset.pattern.permute.xlu0 17
        %1456 = vperm.xlu0 %1455, %v1118
        %v1457 = vpop.permute.xlu0 %1456
        %1459 = vset.pattern.permute.xlu0 17
        %1460 = vperm.xlu0 %1459, %v1119
        %v1461 = vpop.permute.xlu0 %1460
        %1463 = vset.pattern.permute.xlu0 17
        %1464 = vperm.xlu0 %1463, %v1120
        %v1465 = vpop.permute.xlu0 %1464
        %1467 = vset.pattern.permute.xlu0 17
        %1468 = vperm.xlu0 %1467, %v1121
        %v1469 = vpop.permute.xlu0 %1468
        %1471 = vset.pattern.permute.xlu0 17
        %1472 = vperm.xlu0 %1471, %v1122
        %v1473 = vpop.permute.xlu0 %1472
        %1475 = vset.pattern.permute.xlu0 17
        %1476 = vperm.xlu0 %1475, %v1123
        %v1477 = vpop.permute.xlu0 %1476
        %1479 = vset.pattern.permute.xlu0 17
        %1480 = vperm.xlu0 %1479, %v1124
        %v1481 = vpop.permute.xlu0 %1480
        %v1483 = vlaneseq
        %v1484 = vshrl.u32 %v1483, 7
        %v1485 = vsub.s32 0, %v1484
        %v1486 = vrot.slane %v1354, %v1485
        %v1487 = vmul.f32 %v1357, %v1486
        %v1488 = vmul.f32 %v1361, %v1486
        %v1489 = vmul.f32 %v1365, %v1486
        %v1490 = vmul.f32 %v1369, %v1486
        %v1491 = vmul.f32 %v1373, %v1486
        %v1492 = vmul.f32 %v1377, %v1486
        %v1493 = vmul.f32 %v1381, %v1486
        %v1494 = vmul.f32 %v1385, %v1486
        %v1495 = vmul.f32 %v1389, %v1486
        %v1496 = vmul.f32 %v1393, %v1486
        %v1497 = vmul.f32 %v1397, %v1486
        %v1498 = vmul.f32 %v1401, %v1486
        %v1499 = vmul.f32 %v1405, %v1486
        %v1500 = vmul.f32 %v1409, %v1486
        %v1501 = vmul.f32 %v1413, %v1486
        %v1502 = vmul.f32 %v1417, %v1486
        %v1503 = vmul.f32 %v1421, %v1486
        %v1504 = vmul.f32 %v1425, %v1486
        %v1505 = vmul.f32 %v1429, %v1486
        %v1506 = vmul.f32 %v1433, %v1486
        %v1507 = vmul.f32 %v1437, %v1486
        %v1508 = vmul.f32 %v1441, %v1486
        %v1509 = vmul.f32 %v1445, %v1486
        %v1510 = vmul.f32 %v1449, %v1486
        %v1511 = vmul.f32 %v1453, %v1486
        %v1512 = vmul.f32 %v1457, %v1486
        %v1513 = vmul.f32 %v1461, %v1486
        %v1514 = vmul.f32 %v1465, %v1486
        %v1515 = vmul.f32 %v1469, %v1486
        %v1516 = vmul.f32 %v1473, %v1486
        %v1517 = vmul.f32 %v1477, %v1486
        %v1518 = vmul.f32 %v1481, %v1486
        %v1519 = vadd.f32 %v1322, %v1487
        %v1520 = vadd.f32 %v1323, %v1488
        %v1521 = vadd.f32 %v1324, %v1489
        %v1522 = vadd.f32 %v1325, %v1490
        %v1523 = vadd.f32 %v1326, %v1491
        %v1524 = vadd.f32 %v1327, %v1492
        %v1525 = vadd.f32 %v1328, %v1493
        %v1526 = vadd.f32 %v1329, %v1494
        %v1527 = vadd.f32 %v1330, %v1495
        %v1528 = vadd.f32 %v1331, %v1496
        %v1529 = vadd.f32 %v1332, %v1497
        %v1530 = vadd.f32 %v1333, %v1498
        %v1531 = vadd.f32 %v1334, %v1499
        %v1532 = vadd.f32 %v1335, %v1500
        %v1533 = vadd.f32 %v1336, %v1501
        %v1534 = vadd.f32 %v1337, %v1502
        %v1535 = vadd.f32 %v1338, %v1503
        %v1536 = vadd.f32 %v1339, %v1504
        %v1537 = vadd.f32 %v1340, %v1505
        %v1538 = vadd.f32 %v1341, %v1506
        %v1539 = vadd.f32 %v1342, %v1507
        %v1540 = vadd.f32 %v1343, %v1508
        %v1541 = vadd.f32 %v1344, %v1509
        %v1542 = vadd.f32 %v1345, %v1510
        %v1543 = vadd.f32 %v1346, %v1511
        %v1544 = vadd.f32 %v1347, %v1512
        %v1545 = vadd.f32 %v1348, %v1513
        %v1546 = vadd.f32 %v1349, %v1514
        %v1547 = vadd.f32 %v1350, %v1515
        %v1548 = vadd.f32 %v1351, %v1516
        %v1549 = vadd.f32 %v1352, %v1517
        %v1550 = vadd.f32 %v1353, %v1518
        %v1551 = vmax.f32 %v1519, 0.0
        %v1552 = vmax.f32 %v1520, 0.0
        %v1553 = vmax.f32 %v1521, 0.0
        %v1554 = vmax.f32 %v1522, 0.0
        %v1555 = vmax.f32 %v1523, 0.0
        %v1556 = vmax.f32 %v1524, 0.0
        %v1557 = vmax.f32 %v1525, 0.0
        %v1558 = vmax.f32 %v1526, 0.0
        %v1559 = vmax.f32 %v1527, 0.0
        %v1560 = vmax.f32 %v1528, 0.0
        %v1561 = vmax.f32 %v1529, 0.0
        %v1562 = vmax.f32 %v1530, 0.0
        %v1563 = vmax.f32 %v1531, 0.0
        %v1564 = vmax.f32 %v1532, 0.0
        %v1565 = vmax.f32 %v1533, 0.0
        %v1566 = vmax.f32 %v1534, 0.0
        %v1567 = vmax.f32 %v1535, 0.0
        %v1568 = vmax.f32 %v1536, 0.0
        %v1569 = vmax.f32 %v1537, 0.0
        %v1570 = vmax.f32 %v1538, 0.0
        %v1571 = vmax.f32 %v1539, 0.0
        %v1572 = vmax.f32 %v1540, 0.0
        %v1573 = vmax.f32 %v1541, 0.0
        %v1574 = vmax.f32 %v1542, 0.0
        %v1575 = vmax.f32 %v1543, 0.0
        %v1576 = vmax.f32 %v1544, 0.0
        %v1577 = vmax.f32 %v1545, 0.0
        %v1578 = vmax.f32 %v1546, 0.0
        %v1579 = vmax.f32 %v1547, 0.0
        %v1580 = vmax.f32 %v1548, 0.0
        %v1581 = vmax.f32 %v1549, 0.0
        %v1582 = vmax.f32 %v1550, 0.0
        %v1583 = vpack.c.bf16 %v1552, %v1551
        %v1584 = vpack.c.bf16 %v1554, %v1553
        %v1585 = vpack.c.bf16 %v1556, %v1555
        %v1586 = vpack.c.bf16 %v1558, %v1557
        %v1587 = vpack.c.bf16 %v1560, %v1559
        %v1588 = vpack.c.bf16 %v1562, %v1561
        %v1589 = vpack.c.bf16 %v1564, %v1563
        %v1590 = vpack.c.bf16 %v1566, %v1565
        %v1591 = vpack.c.bf16 %v1568, %v1567
        %v1592 = vpack.c.bf16 %v1570, %v1569
        %v1593 = vpack.c.bf16 %v1572, %v1571
        %v1594 = vpack.c.bf16 %v1574, %v1573
        %v1595 = vpack.c.bf16 %v1576, %v1575
        %v1596 = vpack.c.bf16 %v1578, %v1577
        %v1597 = vpack.c.bf16 %v1580, %v1579
        %v1598 = vpack.c.bf16 %v1582, %v1581
        %v1599 = vld [vmem:[%s6] sm:$0x1]
        %v1600 = vld [vmem:[#allocation2] sm:$0x1]
        %1602 = vset.pattern.permute.xlu0 0
        %1603 = vperm.xlu0 %1602, %v1600
        %v1604 = vpop.permute.xlu0 %1603
        %v1606 = vlaneseq
        %v1607 = vshrl.u32 %v1606, 7
        %v1608 = vsub.s32 0, %v1607
        %v1609 = vrot.slane %v1604, %v1608
        %1610 = vmatprep.subr.bf16.mxu0 0
        %1611 = vmatpush1.bf16.xpose.msra.mxu0 %v1583
        %1612 = vmatprep.subr.bf16.mxu0 0
        %1613 = vmatpush1.bf16.xpose.msra.mxu0 %v1584
        %1614 = vmatprep.subr.bf16.mxu0 0
        %1615 = vmatpush1.bf16.xpose.msra.mxu0 %v1585
        %1616 = vmatprep.subr.bf16.mxu0 0
        %1617 = vmatpush1.bf16.xpose.msra.mxu0 %v1586
        %1618 = vmatprep.subr.bf16.mxu0 0
        %1619 = vmatpush1.bf16.xpose.msra.mxu0 %v1587
        %1620 = vmatprep.subr.bf16.mxu0 0
        %1621 = vmatpush1.bf16.xpose.msra.mxu0 %v1588
        %1622 = vmatprep.subr.bf16.mxu0 0
        %1623 = vmatpush1.bf16.xpose.msra.mxu0 %v1589
        %1624 = vmatprep.subr.bf16.mxu0 0
        %1625 = vmatpush1.bf16.xpose.msra.mxu0 %v1590
        %1626 = vmatprep.subr.bf16.mxu0 0
        %1627 = vmatpush1.bf16.xpose.msra.mxu0 %v1591
        %1628 = vmatprep.subr.bf16.mxu0 0
        %1629 = vmatpush1.bf16.xpose.msra.mxu0 %v1592
        %1630 = vmatprep.subr.bf16.mxu0 0
        %1631 = vmatpush1.bf16.xpose.msra.mxu0 %v1593
        %1632 = vmatprep.subr.bf16.mxu0 0
        %1633 = vmatpush1.bf16.xpose.msra.mxu0 %v1594
        %1634 = vmatprep.subr.bf16.mxu0 0
        %1635 = vmatpush1.bf16.xpose.msra.mxu0 %v1595
        %1636 = vmatprep.subr.bf16.mxu0 0
        %1637 = vmatpush1.bf16.xpose.msra.mxu0 %v1596
        %1638 = vmatprep.subr.bf16.mxu0 0
        %1639 = vmatpush1.bf16.xpose.msra.mxu0 %v1597
        %1640 = vmatprep.subr.bf16.mxu0 0
        %1641 = vmatpush1.bf16.xpose.msra.mxu0 %v1598
        %1642 = vmatprep.mubr.bf16.mxu0 0
        %1643 = vmatmul.mubr.bf16.gmra.mrb[0].mxu0 %v1599
        %v1644 = vpop.f32.mrb[0].mxu0
        %v1645 = vadd.f32 %v1609, %v1644
        %v1646 = vpop.f32.mrb[0].mxu0
        %v1647 = vadd.f32 %v1609, %v1646
        %v1648 = vpop.f32.mrb[0].mxu0
        %v1649 = vpop.f32.mrb[0].mxu0
        %1650 = vdwg.mxu0
        %v1653 = vcombine.low %v1645, %v1647
        %v1655 = vunpack.c.l.s4 1966171168
        %v1656 = vunpack.c.0.s8 %v1655
        %v1657 = vlaneseq
        %v1658 = vshrl.u32 %v1657, 7
        %v1659 = vsub.s32 %v1656, %v1658
        %v1660 = vrot.slane %v1653, %v1659
        %v1662 = vunpack.c.l.s4 1966171168
        %v1663 = vunpack.c.0.s8 %v1662
        %v1664 = vlaneseq
        %v1665 = vshrl.u32 %v1664, 7
        %v1666 = vsub.s32 %v1663, %v1665
        %v1667 = vrot.slane %v1660, %v1666
        %v1669 = vlaneseq
        %vm1670 = vcmp.ge.s32.totalorder %v1669, 0
        %vm1671 = vcmp.lt.s32.totalorder %v1669, 256
        %vm1672 = vmand %vm1670, %vm1671
        %1673 = vst.msk [vmem:[%s301] sm:$0x3] %vm1672, %v1667
        %s1674 = sand.u32 %s205, 1
        %s1675 = scalar_lea.sflag [#allocation4], %s1674
        %s1676 = sand.u32 %s205, 1
        %s1677 = smul.addr %s1676, 2
        %s1678 = scalar_lea.vmem [#allocation3], %s1677
        // Predicated region
        $region53: #{tpu_custom_call.1} parent=51 // pred_check
          %p1679 = pneg %p215
        $region54: #{tpu_custom_call.1} parent=51 // pred_check_branch
          %1681 = sbr.rel (%p1679) target = $region56
        $region55: #{tpu_custom_call.1} parent=51 // pred_region
          %s1682 = smul.u32 2, %s24
          %s1684 = ssub.s32 32, 32
          %1685 = vsyncadd %s1675, %s1684
          %s1686 = smul.addr %s1682, 16
          %s1687 = scalar_lea.hbm %s8, %s1686
          %s1689 = sshll.u32 %s1678, 4
          %s1690 = int_to_ptr.vmem [resolvable:$true] %s1689
          %1692 = dma.vmem_to_hbm [thread:$0]  %s1690, 32, %s1687, %s1675
        $region56: #{tpu_custom_call.1} parent=51 // pred_fallthru
          _
      $region52: #{tpu_custom_call.1} parent=5 // pred_fallthru
        _
      %p1693 = scmp.le.s32.totalorder 2, %s19
      // Predicated region
      $region57: #{tpu_custom_call.1} parent=5 // pred_check
        %p1694 = pneg %p1693
      $region58: #{tpu_custom_call.1} parent=5 // pred_check_branch
        %1696 = sbr.rel (%p1694) target = $region60
      $region59: #{tpu_custom_call.1} parent=5 // pred_region
        %s1697 = ssub.s32 %s19, 2
        // Predicated region
        $region61: #{tpu_custom_call.1} parent=59 // pred_check
          %p1698 = pneg %p221
        $region62: #{tpu_custom_call.1} parent=59 // pred_check_branch
          %1700 = sbr.rel (%p1698) target = $region64
        $region63: #{tpu_custom_call.1} parent=59 // pred_region
          %s1701 = sand.u32 %s206, 1
          %s1702 = scalar_lea.sflag [#allocation4], %s1701
          %s1703 = sand.u32 %s206, 1
          %s1704 = smul.addr %s1703, 2
          %s1705 = scalar_lea.vmem [#allocation3], %s1704
          %1706 = dma.done %s1702, 32
        $region64: #{tpu_custom_call.1} parent=59 // pred_fallthru
          _
      $region60: #{tpu_custom_call.1} parent=5 // pred_fallthru
        _
    $region6: #{tpu_custom_call.1} parent=1 // loop_footer
      %s23 = sadd.s32 1, %s19
    $region7: #{tpu_custom_call.1} parent=1 // loop_footer_branch
      %18 = sbr.rel target = $region3
    $region8: #{tpu_custom_call.1} parent=1 // loop_exit
      _
    %1707 = vsyncpa [#allocation4], 1
    %s1708 = scalar_lea.sflag [#allocation4], 1
    %1709 = vsyncpa %s1708, 1

</llo_original>
